<compile_context>
chip_gen: v5e
topology: v5e:2x2
jax: 0.10.0
libtpu: 0.0.40
codegen_flags: <defaults>
</compile_context>

<pallas_src>
import math

import numpy as np
import jax
import jax.numpy as jnp
from jax.experimental import pallas as pl
from jax.experimental.pallas import tpu as pltpu

EPS = 1e-5  # InstanceNorm2d default eps


# ------------------------------ Pallas kernel -------------------------------
def _instance_norm_relu(y):
    """Single-pass InstanceNorm (affine=False, biased var) + ReLU on (HW, C) f32."""
    hw = y.shape[0]
    s = jnp.sum(y, axis=0, keepdims=True)
    ss = jnp.sum(y * y, axis=0, keepdims=True)
    mean = s * (1.0 / hw)
    var = jnp.maximum(ss * (1.0 / hw) - mean * mean, 0.0)
    inv = jax.lax.rsqrt(var + EPS)
    return jnp.maximum((y - mean) * inv, 0.0)


def encoder_kernel(p1_ref, w1_ref, g2_ref, w2_ref, g3_ref, w3_ref, o_ref):
    # One grid step == one batch sample. All three ConvBlocks are fused;
    # intermediates stay in VMEM/vregs. Conv bias omitted (no-op under
    # affine=False InstanceNorm).

    # ---- ConvBlock 1: precomputed im2col patches (K padded to mult. of 8) ----
    p1 = p1_ref[0]                                                   # (HW1, K1p)
    y1 = jnp.dot(p1, w1_ref[...], preferred_element_type=jnp.float32)  # (HW1, C1)
    a1 = _instance_norm_relu(y1)

    # ---- ConvBlock 2: in-kernel im2col via 9 gather-matrix matmuls ----
    n_tap = g2_ref.shape[0]
    hw2 = g2_ref.shape[1]
    c2 = w2_ref.shape[2]
    y2 = jnp.zeros((hw2, c2), jnp.float32)
    for t in range(n_tap):
        patch = jnp.dot(g2_ref[t], a1, preferred_element_type=jnp.float32)   # (HW2, C1)
        y2 = y2 + jnp.dot(patch, w2_ref[t], preferred_element_type=jnp.float32)
    a2 = _instance_norm_relu(y2)                                     # (HW2, C2)

    # ---- ConvBlock 3 ----
    hw3 = g3_ref.shape[1]
    c3 = w3_ref.shape[2]
    y3 = jnp.zeros((hw3, c3), jnp.float32)
    for t in range(n_tap):
        patch = jnp.dot(g3_ref[t], a2, preferred_element_type=jnp.float32)   # (HW3, C2)
        y3 = y3 + jnp.dot(patch, w3_ref[t], preferred_element_type=jnp.float32)
    o_ref[0] = _instance_norm_relu(y3)                               # (HW3, C3)


# ------------------------------- host helpers --------------------------------
def _make_gather(h_in, w_in, k=3, stride=2, pad=1):
    """0/1 gather matrices G[tap] : (Ho*Wo, H*W); zero rows encode zero-padding."""
    ho = (h_in + 2 * pad - k) // stride + 1
    wo = (w_in + 2 * pad - k) // stride + 1
    g = np.zeros((k * k, ho * wo, h_in * w_in), np.float32)
    for ki in range(k):
        for kj in range(k):
            t = ki * k + kj
            for oi in range(ho):
                r = oi * stride + ki - pad
                if not (0 <= r < h_in):
                    continue
                for oj in range(wo):
                    c = oj * stride + kj - pad
                    if 0 <= c < w_in:
                        g[t, oi * wo + oj, r * w_in + c] = 1.0
    return jnp.asarray(g), ho, wo


def _im2col(x_nhwc, k=3, stride=2, pad=1):
    """Layer-1 patches (tiny, one-time glue on the raw input): (N, Ho*Wo, k*k*C)."""
    n, h, w, c = x_nhwc.shape
    xp = jnp.pad(x_nhwc, ((0, 0), (pad, pad), (pad, pad), (0, 0)))
    ho = (h + 2 * pad - k) // stride + 1
    wo = (w + 2 * pad - k) // stride + 1
    cols = [xp[:, ki:ki + stride * ho:stride, kj:kj + stride * wo:stride, :]
            for ki in range(k) for kj in range(k)]
    p = jnp.stack(cols, axis=3).reshape(n, ho * wo, k * k * c)
    return p, ho, wo


def init_encoder(key, num_filter=32, in_ch=3, img_hw=16, refl_pad=3):
    """PyTorch-default-style init + precomputed kernel-side matrices."""
    chans = [in_ch, num_filter, num_filter * 2, num_filter * 4]
    keys = jax.random.split(key, 3)
    ws, bs = [], []
    for i, lk in enumerate(keys):
        c_in, c_out = chans[i], chans[i + 1]
        bound = 1.0 / math.sqrt(c_in * 9)
        kw, kb = jax.random.split(lk)
        ws.append(jax.random.uniform(kw, (c_out, c_in, 3, 3), jnp.float32, -bound, bound))
        bs.append(jax.random.uniform(kb, (c_out,), jnp.float32, -bound, bound))

    h1 = img_hw + 2 * refl_pad            # after ReflectionPad2d(3)
    h2 = (h1 - 1) // 2 + 1                # after conv1 (k=3, s=2, p=1)
    h3 = (h2 - 1) // 2 + 1                # after conv2

    # layer 1 weight as an im2col matmul matrix; rows (K) zero-padded to mult. of 8
    k1 = 9 * chans[0]
    k1p = -(-k1 // 8) * 8
    w1_mat = jnp.transpose(ws[0], (2, 3, 1, 0)).reshape(k1, chans[1])
    w1_mat = jnp.pad(w1_mat, ((0, k1p - k1), (0, 0)))

    # per-tap weights (tap = kh*3 + kw) for the in-kernel layers
    w2_taps = jnp.transpose(ws[1], (2, 3, 1, 0)).reshape(9, chans[1], chans[2])
    w3_taps = jnp.transpose(ws[2], (2, 3, 1, 0)).reshape(9, chans[2], chans[3])

    g2, _, _ = _make_gather(h2, h2)       # conv2: 11x11 -> 6x6
    g3, _, _ = _make_gather(h3, h3)       # conv3: 6x6  -> 3x3

    enc_params = {"w1_mat": w1_mat, "w2_taps": w2_taps, "w3_taps": w3_taps,
                  "g2": g2, "g3": g3}
    return enc_params, ws, bs


# ------------------------------ fused forward --------------------------------
def encoder_forward(x_nchw, enc_params):
    n = x_nchw.shape[0]
    w1_mat = enc_params["w1_mat"]
    w2_taps = enc_params["w2_taps"]
    w3_taps = enc_params["w3_taps"]
    g2 = enc_params["g2"]
    g3 = enc_params["g3"]

    k1p, c1 = w1_mat.shape
    _, hw2, hw1 = g2.shape
    _, hw3, _ = g3.shape
    c2 = w2_taps.shape[2]
    c3 = w3_taps.shape[2]
    h_out = math.isqrt(hw3)

    # ReflectionPad2d(3) + NCHW->NHWC + layer-1 im2col (one-time, tiny glue).
    xp = jnp.pad(x_nchw, ((0, 0), (0, 0), (3, 3), (3, 3)), mode="reflect")
    x_nhwc = jnp.transpose(xp, (0, 2, 3, 1))
    p1, ho1, wo1 = _im2col(x_nhwc, k=3, stride=2, pad=1)
    assert ho1 * wo1 == hw1
    p1 = jnp.pad(p1, ((0, 0), (0, 0), (0, k1p - p1.shape[-1])))      # K 27 -> 32

    flops = 2 * n * (
        hw1 * k1p * c1
        + 9 * (hw2 * hw1 * c1 + hw2 * c1 * c2)
        + 9 * (hw3 * hw2 * c2 + hw3 * c2 * c3)
    )
    transcendentals = n * (c1 + c2 + c3)
    bytes_accessed = 4 * (p1.size + w1_mat.size + g2.size + w2_taps.size
                          + g3.size + w3_taps.size + n * hw3 * c3)

    out = pl.pallas_call(
        encoder_kernel,
        out_shape=jax.ShapeDtypeStruct((n, hw3, c3), jnp.float32),
        grid=(n,),
        in_specs=[
            pl.BlockSpec((1, hw1, k1p), lambda i: (i, 0, 0)),        # layer-1 patches
            pl.BlockSpec((k1p, c1), lambda i: (0, 0)),               # w1
            pl.BlockSpec((9, hw2, hw1), lambda i: (0, 0, 0)),        # gather, layer 2
            pl.BlockSpec((9, c1, c2), lambda i: (0, 0, 0)),          # w2 per tap
            pl.BlockSpec((9, hw3, hw2), lambda i: (0, 0, 0)),        # gather, layer 3
            pl.BlockSpec((9, c2, c3), lambda i: (0, 0, 0)),          # w3 per tap
        ],
        out_specs=pl.BlockSpec((1, hw3, c3), lambda i: (i, 0, 0)),   # 128-lane dense
        compiler_params=pltpu.CompilerParams(
            dimension_semantics=("parallel",)),                      # 1 sample / TC on v7x
        cost_estimate=pl.CostEstimate(
            flops=flops, transcendentals=transcendentals,
            bytes_accessed=bytes_accessed),
    )(p1, w1_mat, g2, w2_taps, g3, w3_taps)

    # (N, 3*3, 128) -> NCHW (N, 128, 3, 3); rows are (oi*Wo + oj) ordered.
    return jnp.transpose(out.reshape(n, h_out, h_out, c3), (0, 3, 1, 2))


# -------------------------- pure-JAX reference check -------------------------
def _ref_conv_block(x, w_oihw, b):
    y = jax.lax.conv_general_dilated(
        x, w_oihw, window_strides=(2, 2), padding=((1, 1), (1, 1)),
        dimension_numbers=("NCHW", "OIHW", "NCHW"))
    y = y + b.reshape(1, -1, 1, 1)                       # bias kept in reference
    m = y.mean(axis=(2, 3), keepdims=True)
    v = ((y - m) ** 2).mean(axis=(2, 3), keepdims=True)
    return jnp.maximum((y - m) * jax.lax.rsqrt(v + EPS), 0.0)


def ref_encoder(x_nchw, ws, bs):
    x = jnp.pad(x_nchw, ((0, 0), (0, 0), (3, 3), (3, 3)), mode="reflect")
    for w, b in zip(ws, bs):
        x = _ref_conv_block(x, w, b)
    return x


# ----------------------------------- main ------------------------------------
if __name__ == "__main__":
    num_filter = 32
    key = jax.random.PRNGKey(0)
    kx, kp = jax.random.split(key)

    # Small deterministic NCHW input, PyTorch convention: (batch=2, C=3, 16, 16)
    x = jax.random.normal(kx, (2, 3, 16, 16), jnp.float32)

    enc_params, ref_ws, ref_bs = init_encoder(kp, num_filter=num_filter)

    fwd = jax.jit(encoder_forward)
    out = jax.block_until_ready(fwd(x, enc_params))
    assert out.shape == (2, num_filter * 4, 3, 3), out.shape

    ref = jax.block_until_ready(ref_encoder(x, ref_ws, ref_bs))
    max_err = float(jnp.max(jnp.abs(out - ref)))
    assert jnp.allclose(out, ref, atol=1e-3, rtol=1e-3), max_err

    print("KERNEL_OK")
</pallas_src>

<mosaic_0001>
module attributes {stable_mosaic.version = 11 : i64} {
  func.func @encoder_kernel(%arg0: i32, %arg1: memref<1x121x32xf32, #tpu.memory_space<vmem>>, %arg2: memref<32x32xf32, #tpu.memory_space<vmem>>, %arg3: memref<9x36x121xf32, #tpu.memory_space<vmem>>, %arg4: memref<9x32x64xf32, #tpu.memory_space<vmem>>, %arg5: memref<9x9x36xf32, #tpu.memory_space<vmem>>, %arg6: memref<9x64x128xf32, #tpu.memory_space<vmem>>, %arg7: memref<1x9x128xf32, #tpu.memory_space<vmem>>) attributes {dimension_semantics = [#tpu.dimension_semantics<parallel>], iteration_bounds = array<i64: 2>, scalar_prefetch = 0 : i64, scratch_operands = 0 : i64, tpu.core_type = #tpu.core_type<tc>, window_params = [{transform_indices = @transform_0, window_bounds = array<i64: 1, 121, 32>}, {pipeline_mode = #tpu.pipeline_mode<synchronous>, transform_indices = @transform_1, window_bounds = array<i64: 32, 32>}, {pipeline_mode = #tpu.pipeline_mode<synchronous>, transform_indices = @transform_2, window_bounds = array<i64: 9, 36, 121>}, {pipeline_mode = #tpu.pipeline_mode<synchronous>, transform_indices = @transform_3, window_bounds = array<i64: 9, 32, 64>}, {pipeline_mode = #tpu.pipeline_mode<synchronous>, transform_indices = @transform_4, window_bounds = array<i64: 9, 9, 36>}, {pipeline_mode = #tpu.pipeline_mode<synchronous>, transform_indices = @transform_5, window_bounds = array<i64: 9, 64, 128>}, {transform_indices = @transform_6, window_bounds = array<i64: 1, 9, 128>}]} {
    %c0 = arith.constant 0 : index
    %c0_0 = arith.constant 0 : index
    %c0_1 = arith.constant 0 : index
    %0 = vector.load %arg1[%c0, %c0_0, %c0_1] : memref<1x121x32xf32, #tpu.memory_space<vmem>>, vector<1x121x32xf32>
    %1 = vector.shape_cast %0 : vector<1x121x32xf32> to vector<121x32xf32>
    %c0_2 = arith.constant 0 : index
    %c0_3 = arith.constant 0 : index
    %2 = vector.load %arg2[%c0_2, %c0_3] : memref<32x32xf32, #tpu.memory_space<vmem>>, vector<32x32xf32>
    %cst = arith.constant dense<0.000000e+00> : vector<121x32xf32>
    %3 = tpu.matmul %1, %2, %cst {dimension_numbers = #tpu.dot_dimension_numbers<[1], [0], [0], [1], [0, 0, 1, 1], [], []>} : vector<121x32xf32>, vector<32x32xf32>, vector<121x32xf32> -> vector<121x32xf32>
    %cst_4 = arith.constant dense<0.000000e+00> : vector<32xf32>
    %4 = vector.multi_reduction <add>, %3, %cst_4 [0] : vector<121x32xf32> to vector<32xf32>
    %5 = vector.shape_cast %4 : vector<32xf32> to vector<1x32xf32>
    %6 = arith.mulf %3, %3 : vector<121x32xf32>
    %cst_5 = arith.constant dense<0.000000e+00> : vector<32xf32>
    %7 = vector.multi_reduction <add>, %6, %cst_5 [0] : vector<121x32xf32> to vector<32xf32>
    %8 = vector.shape_cast %7 : vector<32xf32> to vector<1x32xf32>
    %cst_6 = arith.constant 0.00826446246 : f32
    %9 = vector.broadcast %cst_6 : f32 to vector<1x32xf32>
    %10 = arith.mulf %5, %9 : vector<1x32xf32>
    %cst_7 = arith.constant 0.00826446246 : f32
    %11 = vector.broadcast %cst_7 : f32 to vector<1x32xf32>
    %12 = arith.mulf %8, %11 : vector<1x32xf32>
    %13 = arith.mulf %10, %10 : vector<1x32xf32>
    %14 = arith.subf %12, %13 : vector<1x32xf32>
    %cst_8 = arith.constant 0.000000e+00 : f32
    %15 = vector.broadcast %cst_8 : f32 to vector<1x32xf32>
    %16 = arith.maximumf %14, %15 : vector<1x32xf32>
    %cst_9 = arith.constant 9.99999974E-6 : f32
    %17 = vector.broadcast %cst_9 : f32 to vector<1x32xf32>
    %18 = arith.addf %16, %17 : vector<1x32xf32>
    %19 = math.rsqrt %18 : vector<1x32xf32>
    %20 = vector.broadcast %10 : vector<1x32xf32> to vector<121x32xf32>
    %21 = arith.subf %3, %20 : vector<121x32xf32>
    %22 = vector.broadcast %19 : vector<1x32xf32> to vector<121x32xf32>
    %23 = arith.mulf %21, %22 : vector<121x32xf32>
    %cst_10 = arith.constant 0.000000e+00 : f32
    %24 = vector.broadcast %cst_10 : f32 to vector<121x32xf32>
    %25 = arith.maximumf %23, %24 : vector<121x32xf32>
    %cst_11 = arith.constant 0.000000e+00 : f32
    %26 = vector.broadcast %cst_11 : f32 to vector<36x64xf32>
    %c0_12 = arith.constant 0 : index
    %c0_13 = arith.constant 0 : index
    %c0_14 = arith.constant 0 : index
    %27 = vector.load %arg3[%c0_12, %c0_13, %c0_14] : memref<9x36x121xf32, #tpu.memory_space<vmem>>, vector<1x36x121xf32>
    %28 = vector.shape_cast %27 : vector<1x36x121xf32> to vector<36x121xf32>
    %cst_15 = arith.constant dense<0.000000e+00> : vector<36x32xf32>
    %29 = tpu.matmul %28, %25, %cst_15 {dimension_numbers = #tpu.dot_dimension_numbers<[1], [0], [0], [1], [0, 0, 1, 1], [], []>} : vector<36x121xf32>, vector<121x32xf32>, vector<36x32xf32> -> vector<36x32xf32>
    %c0_16 = arith.constant 0 : index
    %c0_17 = arith.constant 0 : index
    %c0_18 = arith.constant 0 : index
    %30 = vector.load %arg4[%c0_16, %c0_17, %c0_18] : memref<9x32x64xf32, #tpu.memory_space<vmem>>, vector<1x32x64xf32>
    %31 = vector.shape_cast %30 : vector<1x32x64xf32> to vector<32x64xf32>
    %cst_19 = arith.constant dense<0.000000e+00> : vector<36x64xf32>
    %32 = tpu.matmul %29, %31, %cst_19 {dimension_numbers = #tpu.dot_dimension_numbers<[1], [0], [0], [1], [0, 0, 1, 1], [], []>} : vector<36x32xf32>, vector<32x64xf32>, vector<36x64xf32> -> vector<36x64xf32>
    %33 = arith.addf %26, %32 : vector<36x64xf32>
    %c1 = arith.constant 1 : index
    %c0_20 = arith.constant 0 : index
    %c0_21 = arith.constant 0 : index
    %34 = vector.load %arg3[%c1, %c0_20, %c0_21] : memref<9x36x121xf32, #tpu.memory_space<vmem>>, vector<1x36x121xf32>
    %35 = vector.shape_cast %34 : vector<1x36x121xf32> to vector<36x121xf32>
    %cst_22 = arith.constant dense<0.000000e+00> : vector<36x32xf32>
    %36 = tpu.matmul %35, %25, %cst_22 {dimension_numbers = #tpu.dot_dimension_numbers<[1], [0], [0], [1], [0, 0, 1, 1], [], []>} : vector<36x121xf32>, vector<121x32xf32>, vector<36x32xf32> -> vector<36x32xf32>
    %c1_23 = arith.constant 1 : index
    %c0_24 = arith.constant 0 : index
    %c0_25 = arith.constant 0 : index
    %37 = vector.load %arg4[%c1_23, %c0_24, %c0_25] : memref<9x32x64xf32, #tpu.memory_space<vmem>>, vector<1x32x64xf32>
    %38 = vector.shape_cast %37 : vector<1x32x64xf32> to vector<32x64xf32>
    %cst_26 = arith.constant dense<0.000000e+00> : vector<36x64xf32>
    %39 = tpu.matmul %36, %38, %cst_26 {dimension_numbers = #tpu.dot_dimension_numbers<[1], [0], [0], [1], [0, 0, 1, 1], [], []>} : vector<36x32xf32>, vector<32x64xf32>, vector<36x64xf32> -> vector<36x64xf32>
    %40 = arith.addf %33, %39 : vector<36x64xf32>
    %c2 = arith.constant 2 : index
    %c0_27 = arith.constant 0 : index
    %c0_28 = arith.constant 0 : index
    %41 = vector.load %arg3[%c2, %c0_27, %c0_28] : memref<9x36x121xf32, #tpu.memory_space<vmem>>, vector<1x36x121xf32>
    %42 = vector.shape_cast %41 : vector<1x36x121xf32> to vector<36x121xf32>
    %cst_29 = arith.constant dense<0.000000e+00> : vector<36x32xf32>
    %43 = tpu.matmul %42, %25, %cst_29 {dimension_numbers = #tpu.dot_dimension_numbers<[1], [0], [0], [1], [0, 0, 1, 1], [], []>} : vector<36x121xf32>, vector<121x32xf32>, vector<36x32xf32> -> vector<36x32xf32>
    %c2_30 = arith.constant 2 : index
    %c0_31 = arith.constant 0 : index
    %c0_32 = arith.constant 0 : index
    %44 = vector.load %arg4[%c2_30, %c0_31, %c0_32] : memref<9x32x64xf32, #tpu.memory_space<vmem>>, vector<1x32x64xf32>
    %45 = vector.shape_cast %44 : vector<1x32x64xf32> to vector<32x64xf32>
    %cst_33 = arith.constant dense<0.000000e+00> : vector<36x64xf32>
    %46 = tpu.matmul %43, %45, %cst_33 {dimension_numbers = #tpu.dot_dimension_numbers<[1], [0], [0], [1], [0, 0, 1, 1], [], []>} : vector<36x32xf32>, vector<32x64xf32>, vector<36x64xf32> -> vector<36x64xf32>
    %47 = arith.addf %40, %46 : vector<36x64xf32>
    %c3 = arith.constant 3 : index
    %c0_34 = arith.constant 0 : index
    %c0_35 = arith.constant 0 : index
    %48 = vector.load %arg3[%c3, %c0_34, %c0_35] : memref<9x36x121xf32, #tpu.memory_space<vmem>>, vector<1x36x121xf32>
    %49 = vector.shape_cast %48 : vector<1x36x121xf32> to vector<36x121xf32>
    %cst_36 = arith.constant dense<0.000000e+00> : vector<36x32xf32>
    %50 = tpu.matmul %49, %25, %cst_36 {dimension_numbers = #tpu.dot_dimension_numbers<[1], [0], [0], [1], [0, 0, 1, 1], [], []>} : vector<36x121xf32>, vector<121x32xf32>, vector<36x32xf32> -> vector<36x32xf32>
    %c3_37 = arith.constant 3 : index
    %c0_38 = arith.constant 0 : index
    %c0_39 = arith.constant 0 : index
    %51 = vector.load %arg4[%c3_37, %c0_38, %c0_39] : memref<9x32x64xf32, #tpu.memory_space<vmem>>, vector<1x32x64xf32>
    %52 = vector.shape_cast %51 : vector<1x32x64xf32> to vector<32x64xf32>
    %cst_40 = arith.constant dense<0.000000e+00> : vector<36x64xf32>
    %53 = tpu.matmul %50, %52, %cst_40 {dimension_numbers = #tpu.dot_dimension_numbers<[1], [0], [0], [1], [0, 0, 1, 1], [], []>} : vector<36x32xf32>, vector<32x64xf32>, vector<36x64xf32> -> vector<36x64xf32>
    %54 = arith.addf %47, %53 : vector<36x64xf32>
    %c4 = arith.constant 4 : index
    %c0_41 = arith.constant 0 : index
    %c0_42 = arith.constant 0 : index
    %55 = vector.load %arg3[%c4, %c0_41, %c0_42] : memref<9x36x121xf32, #tpu.memory_space<vmem>>, vector<1x36x121xf32>
    %56 = vector.shape_cast %55 : vector<1x36x121xf32> to vector<36x121xf32>
    %cst_43 = arith.constant dense<0.000000e+00> : vector<36x32xf32>
    %57 = tpu.matmul %56, %25, %cst_43 {dimension_numbers = #tpu.dot_dimension_numbers<[1], [0], [0], [1], [0, 0, 1, 1], [], []>} : vector<36x121xf32>, vector<121x32xf32>, vector<36x32xf32> -> vector<36x32xf32>
    %c4_44 = arith.constant 4 : index
    %c0_45 = arith.constant 0 : index
    %c0_46 = arith.constant 0 : index
    %58 = vector.load %arg4[%c4_44, %c0_45, %c0_46] : memref<9x32x64xf32, #tpu.memory_space<vmem>>, vector<1x32x64xf32>
    %59 = vector.shape_cast %58 : vector<1x32x64xf32> to vector<32x64xf32>
    %cst_47 = arith.constant dense<0.000000e+00> : vector<36x64xf32>
    %60 = tpu.matmul %57, %59, %cst_47 {dimension_numbers = #tpu.dot_dimension_numbers<[1], [0], [0], [1], [0, 0, 1, 1], [], []>} : vector<36x32xf32>, vector<32x64xf32>, vector<36x64xf32> -> vector<36x64xf32>
    %61 = arith.addf %54, %60 : vector<36x64xf32>
    %c5 = arith.constant 5 : index
    %c0_48 = arith.constant 0 : index
    %c0_49 = arith.constant 0 : index
    %62 = vector.load %arg3[%c5, %c0_48, %c0_49] : memref<9x36x121xf32, #tpu.memory_space<vmem>>, vector<1x36x121xf32>
    %63 = vector.shape_cast %62 : vector<1x36x121xf32> to vector<36x121xf32>
    %cst_50 = arith.constant dense<0.000000e+00> : vector<36x32xf32>
    %64 = tpu.matmul %63, %25, %cst_50 {dimension_numbers = #tpu.dot_dimension_numbers<[1], [0], [0], [1], [0, 0, 1, 1], [], []>} : vector<36x121xf32>, vector<121x32xf32>, vector<36x32xf32> -> vector<36x32xf32>
    %c5_51 = arith.constant 5 : index
    %c0_52 = arith.constant 0 : index
    %c0_53 = arith.constant 0 : index
    %65 = vector.load %arg4[%c5_51, %c0_52, %c0_53] : memref<9x32x64xf32, #tpu.memory_space<vmem>>, vector<1x32x64xf32>
    %66 = vector.shape_cast %65 : vector<1x32x64xf32> to vector<32x64xf32>
    %cst_54 = arith.constant dense<0.000000e+00> : vector<36x64xf32>
    %67 = tpu.matmul %64, %66, %cst_54 {dimension_numbers = #tpu.dot_dimension_numbers<[1], [0], [0], [1], [0, 0, 1, 1], [], []>} : vector<36x32xf32>, vector<32x64xf32>, vector<36x64xf32> -> vector<36x64xf32>
    %68 = arith.addf %61, %67 : vector<36x64xf32>
    %c6 = arith.constant 6 : index
    %c0_55 = arith.constant 0 : index
    %c0_56 = arith.constant 0 : index
    %69 = vector.load %arg3[%c6, %c0_55, %c0_56] : memref<9x36x121xf32, #tpu.memory_space<vmem>>, vector<1x36x121xf32>
    %70 = vector.shape_cast %69 : vector<1x36x121xf32> to vector<36x121xf32>
    %cst_57 = arith.constant dense<0.000000e+00> : vector<36x32xf32>
    %71 = tpu.matmul %70, %25, %cst_57 {dimension_numbers = #tpu.dot_dimension_numbers<[1], [0], [0], [1], [0, 0, 1, 1], [], []>} : vector<36x121xf32>, vector<121x32xf32>, vector<36x32xf32> -> vector<36x32xf32>
    %c6_58 = arith.constant 6 : index
    %c0_59 = arith.constant 0 : index
    %c0_60 = arith.constant 0 : index
    %72 = vector.load %arg4[%c6_58, %c0_59, %c0_60] : memref<9x32x64xf32, #tpu.memory_space<vmem>>, vector<1x32x64xf32>
    %73 = vector.shape_cast %72 : vector<1x32x64xf32> to vector<32x64xf32>
    %cst_61 = arith.constant dense<0.000000e+00> : vector<36x64xf32>
    %74 = tpu.matmul %71, %73, %cst_61 {dimension_numbers = #tpu.dot_dimension_numbers<[1], [0], [0], [1], [0, 0, 1, 1], [], []>} : vector<36x32xf32>, vector<32x64xf32>, vector<36x64xf32> -> vector<36x64xf32>
    %75 = arith.addf %68, %74 : vector<36x64xf32>
    %c7 = arith.constant 7 : index
    %c0_62 = arith.constant 0 : index
    %c0_63 = arith.constant 0 : index
    %76 = vector.load %arg3[%c7, %c0_62, %c0_63] : memref<9x36x121xf32, #tpu.memory_space<vmem>>, vector<1x36x121xf32>
    %77 = vector.shape_cast %76 : vector<1x36x121xf32> to vector<36x121xf32>
    %cst_64 = arith.constant dense<0.000000e+00> : vector<36x32xf32>
    %78 = tpu.matmul %77, %25, %cst_64 {dimension_numbers = #tpu.dot_dimension_numbers<[1], [0], [0], [1], [0, 0, 1, 1], [], []>} : vector<36x121xf32>, vector<121x32xf32>, vector<36x32xf32> -> vector<36x32xf32>
    %c7_65 = arith.constant 7 : index
    %c0_66 = arith.constant 0 : index
    %c0_67 = arith.constant 0 : index
    %79 = vector.load %arg4[%c7_65, %c0_66, %c0_67] : memref<9x32x64xf32, #tpu.memory_space<vmem>>, vector<1x32x64xf32>
    %80 = vector.shape_cast %79 : vector<1x32x64xf32> to vector<32x64xf32>
    %cst_68 = arith.constant dense<0.000000e+00> : vector<36x64xf32>
    %81 = tpu.matmul %78, %80, %cst_68 {dimension_numbers = #tpu.dot_dimension_numbers<[1], [0], [0], [1], [0, 0, 1, 1], [], []>} : vector<36x32xf32>, vector<32x64xf32>, vector<36x64xf32> -> vector<36x64xf32>
    %82 = arith.addf %75, %81 : vector<36x64xf32>
    %c8 = arith.constant 8 : index
    %c0_69 = arith.constant 0 : index
    %c0_70 = arith.constant 0 : index
    %83 = vector.load %arg3[%c8, %c0_69, %c0_70] : memref<9x36x121xf32, #tpu.memory_space<vmem>>, vector<1x36x121xf32>
    %84 = vector.shape_cast %83 : vector<1x36x121xf32> to vector<36x121xf32>
    %cst_71 = arith.constant dense<0.000000e+00> : vector<36x32xf32>
    %85 = tpu.matmul %84, %25, %cst_71 {dimension_numbers = #tpu.dot_dimension_numbers<[1], [0], [0], [1], [0, 0, 1, 1], [], []>} : vector<36x121xf32>, vector<121x32xf32>, vector<36x32xf32> -> vector<36x32xf32>
    %c8_72 = arith.constant 8 : index
    %c0_73 = arith.constant 0 : index
    %c0_74 = arith.constant 0 : index
    %86 = vector.load %arg4[%c8_72, %c0_73, %c0_74] : memref<9x32x64xf32, #tpu.memory_space<vmem>>, vector<1x32x64xf32>
    %87 = vector.shape_cast %86 : vector<1x32x64xf32> to vector<32x64xf32>
    %cst_75 = arith.constant dense<0.000000e+00> : vector<36x64xf32>
    %88 = tpu.matmul %85, %87, %cst_75 {dimension_numbers = #tpu.dot_dimension_numbers<[1], [0], [0], [1], [0, 0, 1, 1], [], []>} : vector<36x32xf32>, vector<32x64xf32>, vector<36x64xf32> -> vector<36x64xf32>
    %89 = arith.addf %82, %88 : vector<36x64xf32>
    %cst_76 = arith.constant dense<0.000000e+00> : vector<64xf32>
    %90 = vector.multi_reduction <add>, %89, %cst_76 [0] : vector<36x64xf32> to vector<64xf32>
    %91 = vector.shape_cast %90 : vector<64xf32> to vector<1x64xf32>
    %92 = arith.mulf %89, %89 : vector<36x64xf32>
    %cst_77 = arith.constant dense<0.000000e+00> : vector<64xf32>
    %93 = vector.multi_reduction <add>, %92, %cst_77 [0] : vector<36x64xf32> to vector<64xf32>
    %94 = vector.shape_cast %93 : vector<64xf32> to vector<1x64xf32>
    %cst_78 = arith.constant 0.027777778 : f32
    %95 = vector.broadcast %cst_78 : f32 to vector<1x64xf32>
    %96 = arith.mulf %91, %95 : vector<1x64xf32>
    %cst_79 = arith.constant 0.027777778 : f32
    %97 = vector.broadcast %cst_79 : f32 to vector<1x64xf32>
    %98 = arith.mulf %94, %97 : vector<1x64xf32>
    %99 = arith.mulf %96, %96 : vector<1x64xf32>
    %100 = arith.subf %98, %99 : vector<1x64xf32>
    %cst_80 = arith.constant 0.000000e+00 : f32
    %101 = vector.broadcast %cst_80 : f32 to vector<1x64xf32>
    %102 = arith.maximumf %100, %101 : vector<1x64xf32>
    %cst_81 = arith.constant 9.99999974E-6 : f32
    %103 = vector.broadcast %cst_81 : f32 to vector<1x64xf32>
    %104 = arith.addf %102, %103 : vector<1x64xf32>
    %105 = math.rsqrt %104 : vector<1x64xf32>
    %106 = vector.broadcast %96 : vector<1x64xf32> to vector<36x64xf32>
    %107 = arith.subf %89, %106 : vector<36x64xf32>
    %108 = vector.broadcast %105 : vector<1x64xf32> to vector<36x64xf32>
    %109 = arith.mulf %107, %108 : vector<36x64xf32>
    %cst_82 = arith.constant 0.000000e+00 : f32
    %110 = vector.broadcast %cst_82 : f32 to vector<36x64xf32>
    %111 = arith.maximumf %109, %110 : vector<36x64xf32>
    %cst_83 = arith.constant 0.000000e+00 : f32
    %112 = vector.broadcast %cst_83 : f32 to vector<9x128xf32>
    %c0_84 = arith.constant 0 : index
    %c0_85 = arith.constant 0 : index
    %c0_86 = arith.constant 0 : index
    %113 = vector.load %arg5[%c0_84, %c0_85, %c0_86] : memref<9x9x36xf32, #tpu.memory_space<vmem>>, vector<1x9x36xf32>
    %114 = vector.shape_cast %113 : vector<1x9x36xf32> to vector<9x36xf32>
    %cst_87 = arith.constant dense<0.000000e+00> : vector<9x64xf32>
    %115 = tpu.matmul %114, %111, %cst_87 {dimension_numbers = #tpu.dot_dimension_numbers<[1], [0], [0], [1], [0, 0, 1, 1], [], []>} : vector<9x36xf32>, vector<36x64xf32>, vector<9x64xf32> -> vector<9x64xf32>
    %c0_88 = arith.constant 0 : index
    %c0_89 = arith.constant 0 : index
    %c0_90 = arith.constant 0 : index
    %116 = vector.load %arg6[%c0_88, %c0_89, %c0_90] : memref<9x64x128xf32, #tpu.memory_space<vmem>>, vector<1x64x128xf32>
    %117 = vector.shape_cast %116 : vector<1x64x128xf32> to vector<64x128xf32>
    %cst_91 = arith.constant dense<0.000000e+00> : vector<9x128xf32>
    %118 = tpu.matmul %115, %117, %cst_91 {dimension_numbers = #tpu.dot_dimension_numbers<[1], [0], [0], [1], [0, 0, 1, 1], [], []>} : vector<9x64xf32>, vector<64x128xf32>, vector<9x128xf32> -> vector<9x128xf32>
    %119 = arith.addf %112, %118 : vector<9x128xf32>
    %c1_92 = arith.constant 1 : index
    %c0_93 = arith.constant 0 : index
    %c0_94 = arith.constant 0 : index
    %120 = vector.load %arg5[%c1_92, %c0_93, %c0_94] : memref<9x9x36xf32, #tpu.memory_space<vmem>>, vector<1x9x36xf32>
    %121 = vector.shape_cast %120 : vector<1x9x36xf32> to vector<9x36xf32>
    %cst_95 = arith.constant dense<0.000000e+00> : vector<9x64xf32>
    %122 = tpu.matmul %121, %111, %cst_95 {dimension_numbers = #tpu.dot_dimension_numbers<[1], [0], [0], [1], [0, 0, 1, 1], [], []>} : vector<9x36xf32>, vector<36x64xf32>, vector<9x64xf32> -> vector<9x64xf32>
    %c1_96 = arith.constant 1 : index
    %c0_97 = arith.constant 0 : index
    %c0_98 = arith.constant 0 : index
    %123 = vector.load %arg6[%c1_96, %c0_97, %c0_98] : memref<9x64x128xf32, #tpu.memory_space<vmem>>, vector<1x64x128xf32>
    %124 = vector.shape_cast %123 : vector<1x64x128xf32> to vector<64x128xf32>
    %cst_99 = arith.constant dense<0.000000e+00> : vector<9x128xf32>
    %125 = tpu.matmul %122, %124, %cst_99 {dimension_numbers = #tpu.dot_dimension_numbers<[1], [0], [0], [1], [0, 0, 1, 1], [], []>} : vector<9x64xf32>, vector<64x128xf32>, vector<9x128xf32> -> vector<9x128xf32>
    %126 = arith.addf %119, %125 : vector<9x128xf32>
    %c2_100 = arith.constant 2 : index
    %c0_101 = arith.constant 0 : index
    %c0_102 = arith.constant 0 : index
    %127 = vector.load %arg5[%c2_100, %c0_101, %c0_102] : memref<9x9x36xf32, #tpu.memory_space<vmem>>, vector<1x9x36xf32>
    %128 = vector.shape_cast %127 : vector<1x9x36xf32> to vector<9x36xf32>
    %cst_103 = arith.constant dense<0.000000e+00> : vector<9x64xf32>
    %129 = tpu.matmul %128, %111, %cst_103 {dimension_numbers = #tpu.dot_dimension_numbers<[1], [0], [0], [1], [0, 0, 1, 1], [], []>} : vector<9x36xf32>, vector<36x64xf32>, vector<9x64xf32> -> vector<9x64xf32>
    %c2_104 = arith.constant 2 : index
    %c0_105 = arith.constant 0 : index
    %c0_106 = arith.constant 0 : index
    %130 = vector.load %arg6[%c2_104, %c0_105, %c0_106] : memref<9x64x128xf32, #tpu.memory_space<vmem>>, vector<1x64x128xf32>
    %131 = vector.shape_cast %130 : vector<1x64x128xf32> to vector<64x128xf32>
    %cst_107 = arith.constant dense<0.000000e+00> : vector<9x128xf32>
    %132 = tpu.matmul %129, %131, %cst_107 {dimension_numbers = #tpu.dot_dimension_numbers<[1], [0], [0], [1], [0, 0, 1, 1], [], []>} : vector<9x64xf32>, vector<64x128xf32>, vector<9x128xf32> -> vector<9x128xf32>
    %133 = arith.addf %126, %132 : vector<9x128xf32>
    %c3_108 = arith.constant 3 : index
    %c0_109 = arith.constant 0 : index
    %c0_110 = arith.constant 0 : index
    %134 = vector.load %arg5[%c3_108, %c0_109, %c0_110] : memref<9x9x36xf32, #tpu.memory_space<vmem>>, vector<1x9x36xf32>
    %135 = vector.shape_cast %134 : vector<1x9x36xf32> to vector<9x36xf32>
    %cst_111 = arith.constant dense<0.000000e+00> : vector<9x64xf32>
    %136 = tpu.matmul %135, %111, %cst_111 {dimension_numbers = #tpu.dot_dimension_numbers<[1], [0], [0], [1], [0, 0, 1, 1], [], []>} : vector<9x36xf32>, vector<36x64xf32>, vector<9x64xf32> -> vector<9x64xf32>
    %c3_112 = arith.constant 3 : index
    %c0_113 = arith.constant 0 : index
    %c0_114 = arith.constant 0 : index
    %137 = vector.load %arg6[%c3_112, %c0_113, %c0_114] : memref<9x64x128xf32, #tpu.memory_space<vmem>>, vector<1x64x128xf32>
    %138 = vector.shape_cast %137 : vector<1x64x128xf32> to vector<64x128xf32>
    %cst_115 = arith.constant dense<0.000000e+00> : vector<9x128xf32>
    %139 = tpu.matmul %136, %138, %cst_115 {dimension_numbers = #tpu.dot_dimension_numbers<[1], [0], [0], [1], [0, 0, 1, 1], [], []>} : vector<9x64xf32>, vector<64x128xf32>, vector<9x128xf32> -> vector<9x128xf32>
    %140 = arith.addf %133, %139 : vector<9x128xf32>
    %c4_116 = arith.constant 4 : index
    %c0_117 = arith.constant 0 : index
    %c0_118 = arith.constant 0 : index
    %141 = vector.load %arg5[%c4_116, %c0_117, %c0_118] : memref<9x9x36xf32, #tpu.memory_space<vmem>>, vector<1x9x36xf32>
    %142 = vector.shape_cast %141 : vector<1x9x36xf32> to vector<9x36xf32>
    %cst_119 = arith.constant dense<0.000000e+00> : vector<9x64xf32>
    %143 = tpu.matmul %142, %111, %cst_119 {dimension_numbers = #tpu.dot_dimension_numbers<[1], [0], [0], [1], [0, 0, 1, 1], [], []>} : vector<9x36xf32>, vector<36x64xf32>, vector<9x64xf32> -> vector<9x64xf32>
    %c4_120 = arith.constant 4 : index
    %c0_121 = arith.constant 0 : index
    %c0_122 = arith.constant 0 : index
    %144 = vector.load %arg6[%c4_120, %c0_121, %c0_122] : memref<9x64x128xf32, #tpu.memory_space<vmem>>, vector<1x64x128xf32>
    %145 = vector.shape_cast %144 : vector<1x64x128xf32> to vector<64x128xf32>
    %cst_123 = arith.constant dense<0.000000e+00> : vector<9x128xf32>
    %146 = tpu.matmul %143, %145, %cst_123 {dimension_numbers = #tpu.dot_dimension_numbers<[1], [0], [0], [1], [0, 0, 1, 1], [], []>} : vector<9x64xf32>, vector<64x128xf32>, vector<9x128xf32> -> vector<9x128xf32>
    %147 = arith.addf %140, %146 : vector<9x128xf32>
    %c5_124 = arith.constant 5 : index
    %c0_125 = arith.constant 0 : index
    %c0_126 = arith.constant 0 : index
    %148 = vector.load %arg5[%c5_124, %c0_125, %c0_126] : memref<9x9x36xf32, #tpu.memory_space<vmem>>, vector<1x9x36xf32>
    %149 = vector.shape_cast %148 : vector<1x9x36xf32> to vector<9x36xf32>
    %cst_127 = arith.constant dense<0.000000e+00> : vector<9x64xf32>
    %150 = tpu.matmul %149, %111, %cst_127 {dimension_numbers = #tpu.dot_dimension_numbers<[1], [0], [0], [1], [0, 0, 1, 1], [], []>} : vector<9x36xf32>, vector<36x64xf32>, vector<9x64xf32> -> vector<9x64xf32>
    %c5_128 = arith.constant 5 : index
    %c0_129 = arith.constant 0 : index
    %c0_130 = arith.constant 0 : index
    %151 = vector.load %arg6[%c5_128, %c0_129, %c0_130] : memref<9x64x128xf32, #tpu.memory_space<vmem>>, vector<1x64x128xf32>
    %152 = vector.shape_cast %151 : vector<1x64x128xf32> to vector<64x128xf32>
    %cst_131 = arith.constant dense<0.000000e+00> : vector<9x128xf32>
    %153 = tpu.matmul %150, %152, %cst_131 {dimension_numbers = #tpu.dot_dimension_numbers<[1], [0], [0], [1], [0, 0, 1, 1], [], []>} : vector<9x64xf32>, vector<64x128xf32>, vector<9x128xf32> -> vector<9x128xf32>
    %154 = arith.addf %147, %153 : vector<9x128xf32>
    %c6_132 = arith.constant 6 : index
    %c0_133 = arith.constant 0 : index
    %c0_134 = arith.constant 0 : index
    %155 = vector.load %arg5[%c6_132, %c0_133, %c0_134] : memref<9x9x36xf32, #tpu.memory_space<vmem>>, vector<1x9x36xf32>
    %156 = vector.shape_cast %155 : vector<1x9x36xf32> to vector<9x36xf32>
    %cst_135 = arith.constant dense<0.000000e+00> : vector<9x64xf32>
    %157 = tpu.matmul %156, %111, %cst_135 {dimension_numbers = #tpu.dot_dimension_numbers<[1], [0], [0], [1], [0, 0, 1, 1], [], []>} : vector<9x36xf32>, vector<36x64xf32>, vector<9x64xf32> -> vector<9x64xf32>
    %c6_136 = arith.constant 6 : index
    %c0_137 = arith.constant 0 : index
    %c0_138 = arith.constant 0 : index
    %158 = vector.load %arg6[%c6_136, %c0_137, %c0_138] : memref<9x64x128xf32, #tpu.memory_space<vmem>>, vector<1x64x128xf32>
    %159 = vector.shape_cast %158 : vector<1x64x128xf32> to vector<64x128xf32>
    %cst_139 = arith.constant dense<0.000000e+00> : vector<9x128xf32>
    %160 = tpu.matmul %157, %159, %cst_139 {dimension_numbers = #tpu.dot_dimension_numbers<[1], [0], [0], [1], [0, 0, 1, 1], [], []>} : vector<9x64xf32>, vector<64x128xf32>, vector<9x128xf32> -> vector<9x128xf32>
    %161 = arith.addf %154, %160 : vector<9x128xf32>
    %c7_140 = arith.constant 7 : index
    %c0_141 = arith.constant 0 : index
    %c0_142 = arith.constant 0 : index
    %162 = vector.load %arg5[%c7_140, %c0_141, %c0_142] : memref<9x9x36xf32, #tpu.memory_space<vmem>>, vector<1x9x36xf32>
    %163 = vector.shape_cast %162 : vector<1x9x36xf32> to vector<9x36xf32>
    %cst_143 = arith.constant dense<0.000000e+00> : vector<9x64xf32>
    %164 = tpu.matmul %163, %111, %cst_143 {dimension_numbers = #tpu.dot_dimension_numbers<[1], [0], [0], [1], [0, 0, 1, 1], [], []>} : vector<9x36xf32>, vector<36x64xf32>, vector<9x64xf32> -> vector<9x64xf32>
    %c7_144 = arith.constant 7 : index
    %c0_145 = arith.constant 0 : index
    %c0_146 = arith.constant 0 : index
    %165 = vector.load %arg6[%c7_144, %c0_145, %c0_146] : memref<9x64x128xf32, #tpu.memory_space<vmem>>, vector<1x64x128xf32>
    %166 = vector.shape_cast %165 : vector<1x64x128xf32> to vector<64x128xf32>
    %cst_147 = arith.constant dense<0.000000e+00> : vector<9x128xf32>
    %167 = tpu.matmul %164, %166, %cst_147 {dimension_numbers = #tpu.dot_dimension_numbers<[1], [0], [0], [1], [0, 0, 1, 1], [], []>} : vector<9x64xf32>, vector<64x128xf32>, vector<9x128xf32> -> vector<9x128xf32>
    %168 = arith.addf %161, %167 : vector<9x128xf32>
    %c8_148 = arith.constant 8 : index
    %c0_149 = arith.constant 0 : index
    %c0_150 = arith.constant 0 : index
    %169 = vector.load %arg5[%c8_148, %c0_149, %c0_150] : memref<9x9x36xf32, #tpu.memory_space<vmem>>, vector<1x9x36xf32>
    %170 = vector.shape_cast %169 : vector<1x9x36xf32> to vector<9x36xf32>
    %cst_151 = arith.constant dense<0.000000e+00> : vector<9x64xf32>
    %171 = tpu.matmul %170, %111, %cst_151 {dimension_numbers = #tpu.dot_dimension_numbers<[1], [0], [0], [1], [0, 0, 1, 1], [], []>} : vector<9x36xf32>, vector<36x64xf32>, vector<9x64xf32> -> vector<9x64xf32>
    %c8_152 = arith.constant 8 : index
    %c0_153 = arith.constant 0 : index
    %c0_154 = arith.constant 0 : index
    %172 = vector.load %arg6[%c8_152, %c0_153, %c0_154] : memref<9x64x128xf32, #tpu.memory_space<vmem>>, vector<1x64x128xf32>
    %173 = vector.shape_cast %172 : vector<1x64x128xf32> to vector<64x128xf32>
    %cst_155 = arith.constant dense<0.000000e+00> : vector<9x128xf32>
    %174 = tpu.matmul %171, %173, %cst_155 {dimension_numbers = #tpu.dot_dimension_numbers<[1], [0], [0], [1], [0, 0, 1, 1], [], []>} : vector<9x64xf32>, vector<64x128xf32>, vector<9x128xf32> -> vector<9x128xf32>
    %175 = arith.addf %168, %174 : vector<9x128xf32>
    %cst_156 = arith.constant dense<0.000000e+00> : vector<128xf32>
    %176 = vector.multi_reduction <add>, %175, %cst_156 [0] : vector<9x128xf32> to vector<128xf32>
    %177 = vector.shape_cast %176 : vector<128xf32> to vector<1x128xf32>
    %178 = arith.mulf %175, %175 : vector<9x128xf32>
    %cst_157 = arith.constant dense<0.000000e+00> : vector<128xf32>
    %179 = vector.multi_reduction <add>, %178, %cst_157 [0] : vector<9x128xf32> to vector<128xf32>
    %180 = vector.shape_cast %179 : vector<128xf32> to vector<1x128xf32>
    %cst_158 = arith.constant 0.111111112 : f32
    %181 = vector.broadcast %cst_158 : f32 to vector<1x128xf32>
    %182 = arith.mulf %177, %181 : vector<1x128xf32>
    %cst_159 = arith.constant 0.111111112 : f32
    %183 = vector.broadcast %cst_159 : f32 to vector<1x128xf32>
    %184 = arith.mulf %180, %183 : vector<1x128xf32>
    %185 = arith.mulf %182, %182 : vector<1x128xf32>
    %186 = arith.subf %184, %185 : vector<1x128xf32>
    %cst_160 = arith.constant 0.000000e+00 : f32
    %187 = vector.broadcast %cst_160 : f32 to vector<1x128xf32>
    %188 = arith.maximumf %186, %187 : vector<1x128xf32>
    %cst_161 = arith.constant 9.99999974E-6 : f32
    %189 = vector.broadcast %cst_161 : f32 to vector<1x128xf32>
    %190 = arith.addf %188, %189 : vector<1x128xf32>
    %191 = math.rsqrt %190 : vector<1x128xf32>
    %192 = vector.broadcast %182 : vector<1x128xf32> to vector<9x128xf32>
    %193 = arith.subf %175, %192 : vector<9x128xf32>
    %194 = vector.broadcast %191 : vector<1x128xf32> to vector<9x128xf32>
    %195 = arith.mulf %193, %194 : vector<9x128xf32>
    %cst_162 = arith.constant 0.000000e+00 : f32
    %196 = vector.broadcast %cst_162 : f32 to vector<9x128xf32>
    %197 = arith.maximumf %195, %196 : vector<9x128xf32>
    %c0_163 = arith.constant 0 : index
    %c0_164 = arith.constant 0 : index
    %c0_165 = arith.constant 0 : index
    %198 = vector.load %arg7[%c0_163, %c0_164, %c0_165] : memref<1x9x128xf32, #tpu.memory_space<vmem>>, vector<1x9x128xf32>
    %199 = vector.shape_cast %198 : vector<1x9x128xf32> to vector<9x128xf32>
    %200 = vector.shape_cast %197 : vector<9x128xf32> to vector<1x9x128xf32>
    tpu.vector_store %arg7[%c0_163, %c0_164, %c0_165], %200 {strides = array<i32>} : memref<1x9x128xf32, #tpu.memory_space<vmem>>, vector<1x9x128xf32>,
    return
  }
  func.func @transform_0(%arg0: i32) -> (i32, i32, i32) {
    %c0_i32 = arith.constant 0 : i32
    %c0_i32_0 = arith.constant 0 : i32
    %c0_i32_1 = arith.constant 0 : i32
    return %arg0, %c0_i32, %c0_i32_0 : i32, i32, i32
  }
  func.func @transform_1(%arg0: i32) -> (i32, i32) {
    %c0_i32 = arith.constant 0 : i32
    %c0_i32_0 = arith.constant 0 : i32
    %c0_i32_1 = arith.constant 0 : i32
    return %c0_i32, %c0_i32_0 : i32, i32
  }
  func.func @transform_2(%arg0: i32) -> (i32, i32, i32) {
    %c0_i32 = arith.constant 0 : i32
    %c0_i32_0 = arith.constant 0 : i32
    %c0_i32_1 = arith.constant 0 : i32
    %c0_i32_2 = arith.constant 0 : i32
    return %c0_i32, %c0_i32_0, %c0_i32_1 : i32, i32, i32
  }
  func.func @transform_3(%arg0: i32) -> (i32, i32, i32) {
    %c0_i32 = arith.constant 0 : i32
    %c0_i32_0 = arith.constant 0 : i32
    %c0_i32_1 = arith.constant 0 : i32
    %c0_i32_2 = arith.constant 0 : i32
    return %c0_i32, %c0_i32_0, %c0_i32_1 : i32, i32, i32
  }
  func.func @transform_4(%arg0: i32) -> (i32, i32, i32) {
    %c0_i32 = arith.constant 0 : i32
    %c0_i32_0 = arith.constant 0 : i32
    %c0_i32_1 = arith.constant 0 : i32
    %c0_i32_2 = arith.constant 0 : i32
    return %c0_i32, %c0_i32_0, %c0_i32_1 : i32, i32, i32
  }
  func.func @transform_5(%arg0: i32) -> (i32, i32, i32) {
    %c0_i32 = arith.constant 0 : i32
    %c0_i32_0 = arith.constant 0 : i32
    %c0_i32_1 = arith.constant 0 : i32
    %c0_i32_2 = arith.constant 0 : i32
    return %c0_i32, %c0_i32_0, %c0_i32_1 : i32, i32, i32
  }
  func.func @transform_6(%arg0: i32) -> (i32, i32, i32) {
    %c0_i32 = arith.constant 0 : i32
    %c0_i32_0 = arith.constant 0 : i32
    %c0_i32_1 = arith.constant 0 : i32
    return %arg0, %c0_i32, %c0_i32_0 : i32, i32, i32
  }
}

</mosaic_0001>

<llo_original>
// kernel: encoder_forward.1
$region0: #{encoder_forward.1}
  #allocation0 [shape = 'u32[]', space=smem, size = 0x4, offset = 0x4, fixed_abs, tag = 'smem constant byte address 0x4 - core index']
  #allocation1 [shape = 'u32[72,128]{1,0:T(1,128)}', space=vmem, size = 0x9000, scoped, tag = 'internal scratch']
  %s0 = inlined_call_operand.vmem [shape: f32[2,121,32], index: 0, kind: input, shape index: {}]
  %s1 = inlined_call_operand.vmem [shape: f32[32,32], index: 1, kind: input, shape index: {}]
  %s2 = inlined_call_operand.vmem [shape: f32[9,36,121], index: 2, kind: input, shape index: {}]
  %s3 = inlined_call_operand.vmem [shape: f32[9,32,64], index: 3, kind: input, shape index: {}]
  %s4 = inlined_call_operand.vmem [shape: f32[9,9,36], index: 4, kind: input, shape index: {}]
  %s5 = inlined_call_operand.vmem [shape: f32[9,64,128], index: 5, kind: input, shape index: {}]
  %s6 = inlined_call_operand.vmem [shape: f32[2,9,128], index: 6, kind: output, shape index: {}]
  %s7 = sld [smem:[#allocation0]]
  $region57: #{encoder_forward.1} parent=0
    _
  %s9 = ssub.s32 1, %s7
  %s10 = scalar_select 0, %s9, %s7
  loop: start=0, step=1, limit=4
  $region2: #{encoder_forward.1} parent=0 // loop_pre_header
    _
  $region3: #{encoder_forward.1} parent=0 // loop_header
    %s12 = sphi 0, %s16
    %p13 = scmp.ge.s32.totalorder %s12, 4
    %s22 = sphi 0, %s24
    %s25 = sphi 0, %s22
    %s26 = sphi 0, %s25
    %s42 = sphi 0, %s26
    %s46 = sphi 0, %s46
    %s48 = sphi 0, %s46
    %s49 = sphi 0, %s48
    %s63 = sphi 0, %s49
    %s67 = sphi 0, %s67
    %s69 = sphi 0, %s67
    %s70 = sphi 0, %s69
    %s84 = sphi 0, %s70
    %s88 = sphi 0, %s88
    %s90 = sphi 0, %s88
    %s91 = sphi 0, %s90
    %s105 = sphi 0, %s91
    %s109 = sphi 0, %s109
    %s111 = sphi 0, %s109
    %s112 = sphi 0, %s111
    %s126 = sphi 0, %s112
    %s130 = sphi 0, %s130
    %s132 = sphi 0, %s130
    %s133 = sphi 0, %s132
    %s147 = sphi 0, %s133
    %s153 = sphi 0, %s155
    %s156 = sphi 0, %s153
    %s157 = sphi 0, %s156
    %s173 = sphi 0, %s157
  $region4: #{encoder_forward.1} parent=0 // loop_header_branch
    %15 = sbr.rel (%p13) target = $region8
  $region5: #{encoder_forward.1} parent=0 // loop_body
    %s17 = ssub.s32 %s12, 1
    %s18 = ssub.s32 %s12, 2
    %s19 = sadd.s32 %s12, 1
    %s20 = ssub.s32 %s12, %s19
    %p21 = scmp.eq.s32.totalorder %s20, 0
    %s23 = sadd.s32 %s22, 1
    %s24 = scalar_select %p21, %s22, %s23
    %p27 = pneg %p21
    %p28 = scmp.eq.s32.totalorder %s12, 1
    %p29 = por %p27, %p28
    %p30 = scmp.ne.s32.totalorder %s22, %s25
    %p31 = scmp.eq.s32.totalorder %s12, 0
    %p32 = por %p30, %p31
    %p33 = scmp.ne.s32.totalorder %s22, %s25
    %p34 = scmp.eq.s32.totalorder %s17, 1
    %p35 = por %p33, %p34
    %p36 = scmp.ne.s32.totalorder %s25, %s26
    %p37 = scmp.eq.s32.totalorder %s17, 0
    %p38 = por %p36, %p37
    %p39 = scmp.ne.s32.totalorder %s25, %s26
    %p40 = scmp.eq.s32.totalorder %s18, 1
    %p41 = por %p39, %p40
    %p43 = scmp.ne.s32.totalorder %s26, %s42
    %p44 = scmp.eq.s32.totalorder %s18, 0
    %p45 = por %p43, %p44
    %s47 = sadd.s32 %s46, 1
    %p50 = scmp.eq.s32.totalorder %s12, 1
    %p51 = scmp.ne.s32.totalorder %s46, %s48
    %p52 = scmp.eq.s32.totalorder %s12, 0
    %p53 = por %p51, %p52
    %p54 = scmp.ne.s32.totalorder %s46, %s48
    %p55 = scmp.eq.s32.totalorder %s17, 1
    %p56 = por %p54, %p55
    %p57 = scmp.ne.s32.totalorder %s48, %s49
    %p58 = scmp.eq.s32.totalorder %s17, 0
    %p59 = por %p57, %p58
    %p60 = scmp.ne.s32.totalorder %s48, %s49
    %p61 = scmp.eq.s32.totalorder %s18, 1
    %p62 = por %p60, %p61
    %p64 = scmp.ne.s32.totalorder %s49, %s63
    %p65 = scmp.eq.s32.totalorder %s18, 0
    %p66 = por %p64, %p65
    %s68 = sadd.s32 %s67, 1
    %p71 = scmp.eq.s32.totalorder %s12, 1
    %p72 = scmp.ne.s32.totalorder %s67, %s69
    %p73 = scmp.eq.s32.totalorder %s12, 0
    %p74 = por %p72, %p73
    %p75 = scmp.ne.s32.totalorder %s67, %s69
    %p76 = scmp.eq.s32.totalorder %s17, 1
    %p77 = por %p75, %p76
    %p78 = scmp.ne.s32.totalorder %s69, %s70
    %p79 = scmp.eq.s32.totalorder %s17, 0
    %p80 = por %p78, %p79
    %p81 = scmp.ne.s32.totalorder %s69, %s70
    %p82 = scmp.eq.s32.totalorder %s18, 1
    %p83 = por %p81, %p82
    %p85 = scmp.ne.s32.totalorder %s70, %s84
    %p86 = scmp.eq.s32.totalorder %s18, 0
    %p87 = por %p85, %p86
    %s89 = sadd.s32 %s88, 1
    %p92 = scmp.eq.s32.totalorder %s12, 1
    %p93 = scmp.ne.s32.totalorder %s88, %s90
    %p94 = scmp.eq.s32.totalorder %s12, 0
    %p95 = por %p93, %p94
    %p96 = scmp.ne.s32.totalorder %s88, %s90
    %p97 = scmp.eq.s32.totalorder %s17, 1
    %p98 = por %p96, %p97
    %p99 = scmp.ne.s32.totalorder %s90, %s91
    %p100 = scmp.eq.s32.totalorder %s17, 0
    %p101 = por %p99, %p100
    %p102 = scmp.ne.s32.totalorder %s90, %s91
    %p103 = scmp.eq.s32.totalorder %s18, 1
    %p104 = por %p102, %p103
    %p106 = scmp.ne.s32.totalorder %s91, %s105
    %p107 = scmp.eq.s32.totalorder %s18, 0
    %p108 = por %p106, %p107
    %s110 = sadd.s32 %s109, 1
    %p113 = scmp.eq.s32.totalorder %s12, 1
    %p114 = scmp.ne.s32.totalorder %s109, %s111
    %p115 = scmp.eq.s32.totalorder %s12, 0
    %p116 = por %p114, %p115
    %p117 = scmp.ne.s32.totalorder %s109, %s111
    %p118 = scmp.eq.s32.totalorder %s17, 1
    %p119 = por %p117, %p118
    %p120 = scmp.ne.s32.totalorder %s111, %s112
    %p121 = scmp.eq.s32.totalorder %s17, 0
    %p122 = por %p120, %p121
    %p123 = scmp.ne.s32.totalorder %s111, %s112
    %p124 = scmp.eq.s32.totalorder %s18, 1
    %p125 = por %p123, %p124
    %p127 = scmp.ne.s32.totalorder %s112, %s126
    %p128 = scmp.eq.s32.totalorder %s18, 0
    %p129 = por %p127, %p128
    %s131 = sadd.s32 %s130, 1
    %p134 = scmp.eq.s32.totalorder %s12, 1
    %p135 = scmp.ne.s32.totalorder %s130, %s132
    %p136 = scmp.eq.s32.totalorder %s12, 0
    %p137 = por %p135, %p136
    %p138 = scmp.ne.s32.totalorder %s130, %s132
    %p139 = scmp.eq.s32.totalorder %s17, 1
    %p140 = por %p138, %p139
    %p141 = scmp.ne.s32.totalorder %s132, %s133
    %p142 = scmp.eq.s32.totalorder %s17, 0
    %p143 = por %p141, %p142
    %p144 = scmp.ne.s32.totalorder %s132, %s133
    %p145 = scmp.eq.s32.totalorder %s18, 1
    %p146 = por %p144, %p145
    %p148 = scmp.ne.s32.totalorder %s133, %s147
    %p149 = scmp.eq.s32.totalorder %s18, 0
    %p150 = por %p148, %p149
    %s151 = ssub.s32 %s12, %s19
    %p152 = scmp.eq.s32.totalorder %s151, 0
    %s154 = sadd.s32 %s153, 1
    %s155 = scalar_select %p152, %s153, %s154
    %p158 = pneg %p152
    %p159 = scmp.eq.s32.totalorder %s12, 1
    %p160 = por %p158, %p159
    %p161 = scmp.ne.s32.totalorder %s153, %s156
    %p162 = scmp.eq.s32.totalorder %s12, 0
    %p163 = por %p161, %p162
    %p164 = scmp.ne.s32.totalorder %s153, %s156
    %p165 = scmp.eq.s32.totalorder %s17, 1
    %p166 = por %p164, %p165
    %p167 = scmp.ne.s32.totalorder %s156, %s157
    %p168 = scmp.eq.s32.totalorder %s17, 0
    %p169 = por %p167, %p168
    %p170 = scmp.ne.s32.totalorder %s156, %s157
    %p171 = scmp.eq.s32.totalorder %s18, 1
    %p172 = por %p170, %p171
    %p174 = scmp.ne.s32.totalorder %s157, %s173
    %p175 = scmp.eq.s32.totalorder %s18, 0
    %p176 = por %p174, %p175
    %p177 = scmp.le.s32.totalorder 1, %s12
    %p178 = scmp.lt.s32.totalorder %s12, 3
    %p179 = pnand %p177, %p178
    %p180 = pneg %p179
    // Predicated region
    $region9: #{encoder_forward.1} parent=5 // pred_check
      _
    $region10: #{encoder_forward.1} parent=5 // pred_check_branch
      %182 = sbr.rel (%p179) target = $region12
    $region11: #{encoder_forward.1} parent=5 // pred_region
      %s183 = ssub.s32 %s12, 1
      // Predicated region
      $region13: #{encoder_forward.1} parent=11 // pred_check
        %p184 = pneg %p59
      $region14: #{encoder_forward.1} parent=11 // pred_check_branch
        %186 = sbr.rel (%p184) target = $region16
      $region15: #{encoder_forward.1} parent=11 // pred_region
        _
      $region16: #{encoder_forward.1} parent=11 // pred_fallthru
        _
      // Predicated region
      $region17: #{encoder_forward.1} parent=11 // pred_check
        %p187 = pneg %p80
      $region18: #{encoder_forward.1} parent=11 // pred_check_branch
        %189 = sbr.rel (%p187) target = $region20
      $region19: #{encoder_forward.1} parent=11 // pred_region
        _
      $region20: #{encoder_forward.1} parent=11 // pred_fallthru
        _
      // Predicated region
      $region21: #{encoder_forward.1} parent=11 // pred_check
        %p190 = pneg %p101
      $region22: #{encoder_forward.1} parent=11 // pred_check_branch
        %192 = sbr.rel (%p190) target = $region24
      $region23: #{encoder_forward.1} parent=11 // pred_region
        _
      $region24: #{encoder_forward.1} parent=11 // pred_fallthru
        _
      // Predicated region
      $region25: #{encoder_forward.1} parent=11 // pred_check
        %p193 = pneg %p122
      $region26: #{encoder_forward.1} parent=11 // pred_check_branch
        %195 = sbr.rel (%p193) target = $region28
      $region27: #{encoder_forward.1} parent=11 // pred_region
        _
      $region28: #{encoder_forward.1} parent=11 // pred_fallthru
        _
      // Predicated region
      $region29: #{encoder_forward.1} parent=11 // pred_check
        %p196 = pneg %p143
      $region30: #{encoder_forward.1} parent=11 // pred_check_branch
        %198 = sbr.rel (%p196) target = $region32
      $region31: #{encoder_forward.1} parent=11 // pred_region
        _
      $region32: #{encoder_forward.1} parent=11 // pred_fallthru
        _
    $region12: #{encoder_forward.1} parent=5 // pred_fallthru
      _
    %p199 = scmp.lt.s32.totalorder %s12, 2
    // Predicated region
    $region33: #{encoder_forward.1} parent=5 // pred_check
      %p200 = pneg %p199
    $region34: #{encoder_forward.1} parent=5 // pred_check_branch
      %202 = sbr.rel (%p200) target = $region36
    $region35: #{encoder_forward.1} parent=5 // pred_region
      // Predicated region
      $region37: #{encoder_forward.1} parent=35 // pred_check
        %p203 = pneg %p32
      $region38: #{encoder_forward.1} parent=35 // pred_check_branch
        %205 = sbr.rel (%p203) target = $region40
      $region39: #{encoder_forward.1} parent=35 // pred_region
        %p206 = scmp.lt.s32.totalorder %s12, 1
        %s207 = scalar_select %p206, %s12, 1
        %s208 = smul.addr %s207, 16
        %s209 = smul.addr %s208, 8
        %s210 = scalar_lea.vmem %s0, %s209
      $region40: #{encoder_forward.1} parent=35 // pred_fallthru
        _
    $region36: #{encoder_forward.1} parent=5 // pred_fallthru
      _
    %p211 = scmp.le.s32.totalorder 1, %s12
    %p212 = scmp.lt.s32.totalorder %s12, 3
    %p213 = pnand %p211, %p212
    %p214 = pneg %p213
    // Predicated region
    $region41: #{encoder_forward.1} parent=5 // pred_check
      _
    $region42: #{encoder_forward.1} parent=5 // pred_check_branch
      %216 = sbr.rel (%p213) target = $region44
    $region43: #{encoder_forward.1} parent=5 // pred_region
      %s217 = ssub.s32 %s12, 1
      %p218 = scmp.lt.s32.totalorder %s17, 1
      %s219 = scalar_select %p218, %s17, 1
      %s220 = smul.addr %s219, 16
      %s221 = smul.addr %s220, 8
      %s222 = scalar_lea.vmem %s0, %s221
      %p223 = pneg %p38
      %p224 = pneg %p35
      %p225 = pneg %p59
      %p226 = pneg %p56
      %p227 = pneg %p80
      %p228 = pneg %p77
      %p229 = pneg %p101
      %p230 = pneg %p98
      %p231 = pneg %p122
      %p232 = pneg %p119
      %p233 = pneg %p143
      %p234 = pneg %p140
      %p235 = pneg %p169
      %p236 = pneg %p166
      %p237 = scmp.lt.s32.totalorder %s17, 1
      %s238 = scalar_select %p237, %s17, 1
      %s239 = smul.addr %s238, 2
      %s240 = smul.addr %s239, 8
      %s241 = scalar_lea.vmem %s6, %s240
      %p242 = scmp.lt.s32.totalorder %s17, 1
      %s243 = scalar_select %p242, %s17, 1
      %s244 = smul.addr %s243, 16
      %s245 = smul.addr %s244, 8
      %s246 = scalar_lea.vmem %s0, %s245
      %p247 = scmp.lt.s32.totalorder %s17, 1
      %s248 = scalar_select %p247, %s17, 1
      %s249 = smul.addr %s248, 2
      %s250 = smul.addr %s249, 8
      %s251 = scalar_lea.vmem %s6, %s250
      %v252 = vld [vmem:[%s246] sm:$0xff]
      %v253 = vld [vmem:[%s246 + $0x8] sm:$0xff]
      %v254 = vld [vmem:[%s246 + $0x10] sm:$0xff]
      %v255 = vld [vmem:[%s246 + $0x18] sm:$0xff]
      %v256 = vld [vmem:[%s246 + $0x20] sm:$0xff]
      %v257 = vld [vmem:[%s246 + $0x28] sm:$0xff]
      %v258 = vld [vmem:[%s246 + $0x30] sm:$0xff]
      %v259 = vld [vmem:[%s246 + $0x38] sm:$0xff]
      %v260 = vld [vmem:[%s246 + $0x40] sm:$0xff]
      %v261 = vld [vmem:[%s246 + $0x48] sm:$0xff]
      %v262 = vld [vmem:[%s246 + $0x50] sm:$0xff]
      %v263 = vld [vmem:[%s246 + $0x58] sm:$0xff]
      %v264 = vld [vmem:[%s246 + $0x60] sm:$0xff]
      %v265 = vld [vmem:[%s246 + $0x68] sm:$0xff]
      %v266 = vld [vmem:[%s246 + $0x70] sm:$0xff]
      %v267 = vld [vmem:[%s246 + $0x78] sm:$0x1]
      %v268 = vld [vmem:[%s1] sm:$0xff]
      %v269 = vld [vmem:[%s1 + $0x8] sm:$0xff]
      %v270 = vld [vmem:[%s1 + $0x10] sm:$0xff]
      %v271 = vld [vmem:[%s1 + $0x18] sm:$0xff]
      %vm272 = vcmask 261120
      %v274 = vsel %vm272, %v252, 0
      %v277 = vsel %vm272, %v253, 0
      %v280 = vsel %vm272, %v254, 0
      %v283 = vsel %vm272, %v255, 0
      %v286 = vsel %vm272, %v256, 0
      %v289 = vsel %vm272, %v257, 0
      %v292 = vsel %vm272, %v258, 0
      %v295 = vsel %vm272, %v259, 0
      %v298 = vsel %vm272, %v260, 0
      %v301 = vsel %vm272, %v261, 0
      %v304 = vsel %vm272, %v262, 0
      %v307 = vsel %vm272, %v263, 0
      %v310 = vsel %vm272, %v264, 0
      %v313 = vsel %vm272, %v265, 0
      %v316 = vsel %vm272, %v266, 0
      %v319 = vsel %vm272, %v267, 0
      %321 = vmatpush.msra.mxu0 0.0
      %322 = vmatpush.msra.mxu0 0.0
      %323 = vmatpush.msra.mxu0 0.0
      %324 = vmatpush.msra.mxu0 0.0
      %325 = vmatpush.msra.mxu0 0.0
      %326 = vmatpush.msra.mxu0 0.0
      %327 = vmatpush.msra.mxu0 0.0
      %328 = vmatpush.msra.mxu0 0.0
      %329 = vmatpush.msra.mxu0 0.0
      %330 = vmatpush.msra.mxu0 0.0
      %331 = vmatpush.msra.mxu0 0.0
      %332 = vmatpush.msra.mxu0 0.0
      %333 = vmatpush.msra.mxu0 %v271
      %334 = vmatpush.msra.mxu0 %v270
      %335 = vmatpush.msra.mxu0 %v269
      %336 = vmatpush.msra.mxu0 %v268
      %337 = vmatmul.f32.gmra.mxu0 %v274
      %v338 = vpop.f32.mrf.mxu0
      %v339 = vadd.f32 0.0, %v338
      %340 = vmatmul.f32.gmra.mxu0 %v277
      %v341 = vpop.f32.mrf.mxu0
      %v342 = vadd.f32 0.0, %v341
      %343 = vmatmul.f32.gmra.mxu0 %v280
      %v344 = vpop.f32.mrf.mxu0
      %v345 = vadd.f32 0.0, %v344
      %346 = vmatmul.f32.gmra.mxu0 %v283
      %v347 = vpop.f32.mrf.mxu0
      %v348 = vadd.f32 0.0, %v347
      %349 = vmatmul.f32.gmra.mxu0 %v286
      %v350 = vpop.f32.mrf.mxu0
      %v351 = vadd.f32 0.0, %v350
      %352 = vmatmul.f32.gmra.mxu0 %v289
      %v353 = vpop.f32.mrf.mxu0
      %v354 = vadd.f32 0.0, %v353
      %355 = vmatmul.f32.gmra.mxu0 %v292
      %v356 = vpop.f32.mrf.mxu0
      %v357 = vadd.f32 0.0, %v356
      %358 = vmatmul.f32.gmra.mxu0 %v295
      %v359 = vpop.f32.mrf.mxu0
      %v360 = vadd.f32 0.0, %v359
      %361 = vmatmul.f32.gmra.mxu0 %v298
      %v362 = vpop.f32.mrf.mxu0
      %v363 = vadd.f32 0.0, %v362
      %364 = vmatmul.f32.gmra.mxu0 %v301
      %v365 = vpop.f32.mrf.mxu0
      %v366 = vadd.f32 0.0, %v365
      %367 = vmatmul.f32.gmra.mxu0 %v304
      %v368 = vpop.f32.mrf.mxu0
      %v369 = vadd.f32 0.0, %v368
      %370 = vmatmul.f32.gmra.mxu0 %v307
      %v371 = vpop.f32.mrf.mxu0
      %v372 = vadd.f32 0.0, %v371
      %373 = vmatmul.f32.gmra.mxu0 %v310
      %v374 = vpop.f32.mrf.mxu0
      %v375 = vadd.f32 0.0, %v374
      %376 = vmatmul.f32.gmra.mxu0 %v313
      %v377 = vpop.f32.mrf.mxu0
      %v378 = vadd.f32 0.0, %v377
      %379 = vmatmul.f32.gmra.mxu0 %v316
      %v380 = vpop.f32.mrf.mxu0
      %v381 = vadd.f32 0.0, %v380
      %382 = vmatmul.f32.gmra.mxu0 %v319
      %v383 = vpop.f32.mrf.mxu0
      %v384 = vadd.f32 0.0, %v383
      %385 = vdwg.mxu0
      %v386 = vsel %vm272, %v339, 0.0
      %v387 = vsel %vm272, %v342, 0.0
      %v388 = vadd.f32 %v386, %v387
      %v389 = vsel %vm272, %v345, 0.0
      %v390 = vadd.f32 %v388, %v389
      %v391 = vsel %vm272, %v348, 0.0
      %v392 = vadd.f32 %v390, %v391
      %v393 = vsel %vm272, %v351, 0.0
      %v394 = vadd.f32 %v392, %v393
      %v395 = vsel %vm272, %v354, 0.0
      %v396 = vadd.f32 %v394, %v395
      %v397 = vsel %vm272, %v357, 0.0
      %v398 = vadd.f32 %v396, %v397
      %v399 = vsel %vm272, %v360, 0.0
      %v400 = vadd.f32 %v398, %v399
      %v401 = vsel %vm272, %v363, 0.0
      %v402 = vadd.f32 %v400, %v401
      %v403 = vsel %vm272, %v366, 0.0
      %v404 = vadd.f32 %v402, %v403
      %v405 = vsel %vm272, %v369, 0.0
      %v406 = vadd.f32 %v404, %v405
      %v407 = vsel %vm272, %v372, 0.0
      %v408 = vadd.f32 %v406, %v407
      %v409 = vsel %vm272, %v375, 0.0
      %v410 = vadd.f32 %v408, %v409
      %v411 = vsel %vm272, %v378, 0.0
      %v412 = vadd.f32 %v410, %v411
      %v413 = vsel %vm272, %v381, 0.0
      %v414 = vadd.f32 %v412, %v413
      %vm415 = vcmask 253952
      %v416 = vsel %vm415, %v384, 0.0
      %v417 = vadd.f32 %v414, %v416
      %v418 = vrot.slane %v417, 4
      %v419 = vadd.f32 %v417, %v418
      %v420 = vrot.slane %v419, 2
      %v421 = vadd.f32 %v419, %v420
      %v422 = vrot.slane %v421, 1
      %v423 = vadd.f32 %v421, %v422
      %v424 = vmul.f32 %v339, %v339
      %v425 = vmul.f32 %v342, %v342
      %v426 = vmul.f32 %v345, %v345
      %v427 = vmul.f32 %v348, %v348
      %v428 = vmul.f32 %v351, %v351
      %v429 = vmul.f32 %v354, %v354
      %v430 = vmul.f32 %v357, %v357
      %v431 = vmul.f32 %v360, %v360
      %v432 = vmul.f32 %v363, %v363
      %v433 = vmul.f32 %v366, %v366
      %v434 = vmul.f32 %v369, %v369
      %v435 = vmul.f32 %v372, %v372
      %v436 = vmul.f32 %v375, %v375
      %v437 = vmul.f32 %v378, %v378
      %v438 = vmul.f32 %v381, %v381
      %v439 = vmul.f32 %v384, %v384
      %v440 = vsel %vm272, %v424, 0.0
      %v441 = vsel %vm272, %v425, 0.0
      %v442 = vadd.f32 %v440, %v441
      %v443 = vsel %vm272, %v426, 0.0
      %v444 = vadd.f32 %v442, %v443
      %v445 = vsel %vm272, %v427, 0.0
      %v446 = vadd.f32 %v444, %v445
      %v447 = vsel %vm272, %v428, 0.0
      %v448 = vadd.f32 %v446, %v447
      %v449 = vsel %vm272, %v429, 0.0
      %v450 = vadd.f32 %v448, %v449
      %v451 = vsel %vm272, %v430, 0.0
      %v452 = vadd.f32 %v450, %v451
      %v453 = vsel %vm272, %v431, 0.0
      %v454 = vadd.f32 %v452, %v453
      %v455 = vsel %vm272, %v432, 0.0
      %v456 = vadd.f32 %v454, %v455
      %v457 = vsel %vm272, %v433, 0.0
      %v458 = vadd.f32 %v456, %v457
      %v459 = vsel %vm272, %v434, 0.0
      %v460 = vadd.f32 %v458, %v459
      %v461 = vsel %vm272, %v435, 0.0
      %v462 = vadd.f32 %v460, %v461
      %v463 = vsel %vm272, %v436, 0.0
      %v464 = vadd.f32 %v462, %v463
      %v465 = vsel %vm272, %v437, 0.0
      %v466 = vadd.f32 %v464, %v465
      %v467 = vsel %vm272, %v438, 0.0
      %v468 = vadd.f32 %v466, %v467
      %v469 = vsel %vm415, %v439, 0.0
      %v470 = vadd.f32 %v468, %v469
      %v471 = vrot.slane %v470, 4
      %v472 = vadd.f32 %v470, %v471
      %v473 = vrot.slane %v472, 2
      %v474 = vadd.f32 %v472, %v473
      %v475 = vrot.slane %v474, 1
      %v476 = vadd.f32 %v474, %v475
      %v477 = vmul.f32 %v423, 0.008264462
      %v478 = vmul.f32 %v476, 0.008264462
      %v479 = vmul.f32 %v477, %v477
      %v480 = vsub.f32 %v478, %v479
      %v481 = vmax.f32 %v480, 0.0
      %v482 = vadd.f32 %v481, 1e-05
      %v483 = vrsqrt.pop %v482
      %v484 = vmul.f32 %v483, %v482
      %v485 = vmul.f32 %v484, %v483
      %v486 = vmul.f32 0.5, %v485
      %v487 = vsub.f32 1.5, %v486
      %v488 = vmul.f32 %v483, %v487
      %vm489 = vweird.f32 %v482
      %vm490 = vweird.f32 %v483
      %vm491 = vmor %vm489, %vm490
      %v492 = vsel %vm491, %v483, %v488
      %v493 = vsub.f32 %v339, %v477
      %v494 = vsub.f32 %v342, %v477
      %v495 = vsub.f32 %v345, %v477
      %v496 = vsub.f32 %v348, %v477
      %v497 = vsub.f32 %v351, %v477
      %v498 = vsub.f32 %v354, %v477
      %v499 = vsub.f32 %v357, %v477
      %v500 = vsub.f32 %v360, %v477
      %v501 = vsub.f32 %v363, %v477
      %v502 = vsub.f32 %v366, %v477
      %v503 = vsub.f32 %v369, %v477
      %v504 = vsub.f32 %v372, %v477
      %v505 = vsub.f32 %v375, %v477
      %v506 = vsub.f32 %v378, %v477
      %v507 = vsub.f32 %v381, %v477
      %v508 = vsub.f32 %v384, %v477
      %v509 = vmul.f32 %v493, %v492
      %v510 = vmul.f32 %v494, %v492
      %v511 = vmul.f32 %v495, %v492
      %v512 = vmul.f32 %v496, %v492
      %v513 = vmul.f32 %v497, %v492
      %v514 = vmul.f32 %v498, %v492
      %v515 = vmul.f32 %v499, %v492
      %v516 = vmul.f32 %v500, %v492
      %v517 = vmul.f32 %v501, %v492
      %v518 = vmul.f32 %v502, %v492
      %v519 = vmul.f32 %v503, %v492
      %v520 = vmul.f32 %v504, %v492
      %v521 = vmul.f32 %v505, %v492
      %v522 = vmul.f32 %v506, %v492
      %v523 = vmul.f32 %v507, %v492
      %v524 = vmul.f32 %v508, %v492
      %v525 = vmax.f32 %v509, 0.0
      %v526 = vmax.f32 %v510, 0.0
      %v527 = vmax.f32 %v511, 0.0
      %v528 = vmax.f32 %v512, 0.0
      %v529 = vmax.f32 %v513, 0.0
      %v530 = vmax.f32 %v514, 0.0
      %v531 = vmax.f32 %v515, 0.0
      %v532 = vmax.f32 %v516, 0.0
      %v533 = vmax.f32 %v517, 0.0
      %v534 = vmax.f32 %v518, 0.0
      %v535 = vmax.f32 %v519, 0.0
      %v536 = vmax.f32 %v520, 0.0
      %v537 = vmax.f32 %v521, 0.0
      %v538 = vmax.f32 %v522, 0.0
      %v539 = vmax.f32 %v523, 0.0
      %v540 = vmax.f32 %v524, 0.0
      %v541 = vld [vmem:[%s2] sm:$0xff]
      %v542 = vld [vmem:[%s2 + $0x8] sm:$0xff]
      %v543 = vld [vmem:[%s2 + $0x10] sm:$0xff]
      %v544 = vld [vmem:[%s2 + $0x18] sm:$0xff]
      %v545 = vld [vmem:[%s2 + $0x20] sm:$0xf]
      %vm546 = vcmask 990208
      %v548 = vsel %vm546, %v541, 0
      %v551 = vsel %vm546, %v542, 0
      %v554 = vsel %vm546, %v543, 0
      %v557 = vsel %vm546, %v544, 0
      %v560 = vsel %vm546, %v545, 0
      %vm562 = vcmask 1040384
      %v564 = vsel %vm562, %v540, 0
      %566 = vmatpush.msra.mxu0 %v564
      %567 = vmatpush.msra.mxu0 %v539
      %568 = vmatpush.msra.mxu0 %v538
      %569 = vmatpush.msra.mxu0 %v537
      %570 = vmatpush.msra.mxu0 %v536
      %571 = vmatpush.msra.mxu0 %v535
      %572 = vmatpush.msra.mxu0 %v534
      %573 = vmatpush.msra.mxu0 %v533
      %574 = vmatpush.msra.mxu0 %v532
      %575 = vmatpush.msra.mxu0 %v531
      %576 = vmatpush.msra.mxu0 %v530
      %577 = vmatpush.msra.mxu0 %v529
      %578 = vmatpush.msra.mxu0 %v528
      %579 = vmatpush.msra.mxu0 %v527
      %580 = vmatpush.msra.mxu0 %v526
      %581 = vmatpush.msra.mxu0 %v525
      %582 = vmatmul.f32.gmra.mxu0 %v548
      %v583 = vpop.f32.mrf.mxu0
      %v584 = vadd.f32 0.0, %v583
      %585 = vmatmul.f32.gmra.mxu0 %v551
      %v586 = vpop.f32.mrf.mxu0
      %v587 = vadd.f32 0.0, %v586
      %588 = vmatmul.f32.gmra.mxu0 %v554
      %v589 = vpop.f32.mrf.mxu0
      %v590 = vadd.f32 0.0, %v589
      %591 = vmatmul.f32.gmra.mxu0 %v557
      %v592 = vpop.f32.mrf.mxu0
      %v593 = vadd.f32 0.0, %v592
      %594 = vmatmul.f32.gmra.mxu0 %v560
      %v595 = vpop.f32.mrf.mxu0
      %v596 = vadd.f32 0.0, %v595
      %597 = vdwg.mxu0
      %v598 = vld [vmem:[%s3] sm:$0xff]
      %v599 = vld [vmem:[%s3 + $0x8] sm:$0xff]
      %v600 = vld [vmem:[%s3 + $0x10] sm:$0xff]
      %v601 = vld [vmem:[%s3 + $0x18] sm:$0xff]
      %s602 = scalar_lea.vmem %s2, 40
      %v603 = vld [vmem:[%s602] sm:$0xff]
      %v604 = vld [vmem:[%s602 + $0x8] sm:$0xff]
      %v605 = vld [vmem:[%s602 + $0x10] sm:$0xff]
      %v606 = vld [vmem:[%s602 + $0x18] sm:$0xff]
      %v607 = vld [vmem:[%s602 + $0x20] sm:$0xf]
      %v609 = vsel %vm546, %v603, 0
      %v612 = vsel %vm546, %v604, 0
      %v615 = vsel %vm546, %v605, 0
      %v618 = vsel %vm546, %v606, 0
      %v621 = vsel %vm546, %v607, 0
      %623 = vmatpush.msra.mxu0 %v564
      %624 = vmatpush.msra.mxu0 %v539
      %625 = vmatpush.msra.mxu0 %v538
      %626 = vmatpush.msra.mxu0 %v537
      %627 = vmatpush.msra.mxu0 %v536
      %628 = vmatpush.msra.mxu0 %v535
      %629 = vmatpush.msra.mxu0 %v534
      %630 = vmatpush.msra.mxu0 %v533
      %631 = vmatpush.msra.mxu0 %v532
      %632 = vmatpush.msra.mxu0 %v531
      %633 = vmatpush.msra.mxu0 %v530
      %634 = vmatpush.msra.mxu0 %v529
      %635 = vmatpush.msra.mxu0 %v528
      %636 = vmatpush.msra.mxu0 %v527
      %637 = vmatpush.msra.mxu0 %v526
      %638 = vmatpush.msra.mxu0 %v525
      %639 = vmatmul.f32.gmra.mxu0 %v609
      %v640 = vpop.f32.mrf.mxu0
      %v641 = vadd.f32 0.0, %v640
      %642 = vmatmul.f32.gmra.mxu0 %v612
      %v643 = vpop.f32.mrf.mxu0
      %v644 = vadd.f32 0.0, %v643
      %645 = vmatmul.f32.gmra.mxu0 %v615
      %v646 = vpop.f32.mrf.mxu0
      %v647 = vadd.f32 0.0, %v646
      %648 = vmatmul.f32.gmra.mxu0 %v618
      %v649 = vpop.f32.mrf.mxu0
      %v650 = vadd.f32 0.0, %v649
      %651 = vmatmul.f32.gmra.mxu0 %v621
      %v652 = vpop.f32.mrf.mxu0
      %v653 = vadd.f32 0.0, %v652
      %654 = vdwg.mxu0
      %s655 = scalar_lea.vmem %s3, 32
      %v656 = vld [vmem:[%s655] sm:$0xff]
      %v657 = vld [vmem:[%s655 + $0x8] sm:$0xff]
      %v658 = vld [vmem:[%s655 + $0x10] sm:$0xff]
      %v659 = vld [vmem:[%s655 + $0x18] sm:$0xff]
      %v661 = vsel %vm272, %v641, 0
      %v664 = vsel %vm272, %v644, 0
      %v667 = vsel %vm272, %v647, 0
      %v670 = vsel %vm272, %v650, 0
      %v673 = vsel %vm272, %v653, 0
      %675 = vmatpush.msra.mxu0 0.0
      %676 = vmatpush.msra.mxu0 0.0
      %677 = vmatpush.msra.mxu0 0.0
      %678 = vmatpush.msra.mxu0 0.0
      %679 = vmatpush.msra.mxu0 0.0
      %680 = vmatpush.msra.mxu0 0.0
      %681 = vmatpush.msra.mxu0 0.0
      %682 = vmatpush.msra.mxu0 0.0
      %683 = vmatpush.msra.mxu0 0.0
      %684 = vmatpush.msra.mxu0 0.0
      %685 = vmatpush.msra.mxu0 0.0
      %686 = vmatpush.msra.mxu0 0.0
      %687 = vmatpush.msra.mxu0 %v659
      %688 = vmatpush.msra.mxu0 %v658
      %689 = vmatpush.msra.mxu0 %v657
      %690 = vmatpush.msra.mxu0 %v656
      %691 = vmatmul.f32.gmra.mxu0 %v661
      %v692 = vpop.f32.mrf.mxu0
      %v693 = vadd.f32 0.0, %v692
      %694 = vmatmul.f32.gmra.mxu0 %v664
      %v695 = vpop.f32.mrf.mxu0
      %v696 = vadd.f32 0.0, %v695
      %697 = vmatmul.f32.gmra.mxu0 %v667
      %v698 = vpop.f32.mrf.mxu0
      %v699 = vadd.f32 0.0, %v698
      %700 = vmatmul.f32.gmra.mxu0 %v670
      %v701 = vpop.f32.mrf.mxu0
      %v702 = vadd.f32 0.0, %v701
      %703 = vmatmul.f32.gmra.mxu0 %v673
      %v704 = vpop.f32.mrf.mxu0
      %v705 = vadd.f32 0.0, %v704
      %706 = vdwg.mxu0
      %v708 = vsel %vm272, %v584, 0
      %v711 = vsel %vm272, %v587, 0
      %v714 = vsel %vm272, %v590, 0
      %v717 = vsel %vm272, %v593, 0
      %v720 = vsel %vm272, %v596, 0
      %722 = vmatpush.msra.mxu0 0.0
      %723 = vmatpush.msra.mxu0 0.0
      %724 = vmatpush.msra.mxu0 0.0
      %725 = vmatpush.msra.mxu0 0.0
      %726 = vmatpush.msra.mxu0 0.0
      %727 = vmatpush.msra.mxu0 0.0
      %728 = vmatpush.msra.mxu0 0.0
      %729 = vmatpush.msra.mxu0 0.0
      %730 = vmatpush.msra.mxu0 0.0
      %731 = vmatpush.msra.mxu0 0.0
      %732 = vmatpush.msra.mxu0 0.0
      %733 = vmatpush.msra.mxu0 0.0
      %734 = vmatpush.msra.mxu0 %v601
      %735 = vmatpush.msra.mxu0 %v600
      %736 = vmatpush.msra.mxu0 %v599
      %737 = vmatpush.msra.mxu0 %v598
      %738 = vmatmul.f32.gmra.mxu0 %v708
      %v739 = vpop.f32.mrf.mxu0
      %v740 = vadd.f32 %v693, %v739
      %741 = vmatmul.f32.gmra.mxu0 %v711
      %v742 = vpop.f32.mrf.mxu0
      %v743 = vadd.f32 %v696, %v742
      %744 = vmatmul.f32.gmra.mxu0 %v714
      %v745 = vpop.f32.mrf.mxu0
      %v746 = vadd.f32 %v699, %v745
      %747 = vmatmul.f32.gmra.mxu0 %v717
      %v748 = vpop.f32.mrf.mxu0
      %v749 = vadd.f32 %v702, %v748
      %750 = vmatmul.f32.gmra.mxu0 %v720
      %v751 = vpop.f32.mrf.mxu0
      %v752 = vadd.f32 %v705, %v751
      %753 = vdwg.mxu0
      %s754 = scalar_lea.vmem %s2, 80
      %v755 = vld [vmem:[%s754] sm:$0xff]
      %v756 = vld [vmem:[%s754 + $0x8] sm:$0xff]
      %v757 = vld [vmem:[%s754 + $0x10] sm:$0xff]
      %v758 = vld [vmem:[%s754 + $0x18] sm:$0xff]
      %v759 = vld [vmem:[%s754 + $0x20] sm:$0xf]
      %v761 = vsel %vm546, %v755, 0
      %v764 = vsel %vm546, %v756, 0
      %v767 = vsel %vm546, %v757, 0
      %v770 = vsel %vm546, %v758, 0
      %v773 = vsel %vm546, %v759, 0
      %775 = vmatpush.msra.mxu0 %v564
      %776 = vmatpush.msra.mxu0 %v539
      %777 = vmatpush.msra.mxu0 %v538
      %778 = vmatpush.msra.mxu0 %v537
      %779 = vmatpush.msra.mxu0 %v536
      %780 = vmatpush.msra.mxu0 %v535
      %781 = vmatpush.msra.mxu0 %v534
      %782 = vmatpush.msra.mxu0 %v533
      %783 = vmatpush.msra.mxu0 %v532
      %784 = vmatpush.msra.mxu0 %v531
      %785 = vmatpush.msra.mxu0 %v530
      %786 = vmatpush.msra.mxu0 %v529
      %787 = vmatpush.msra.mxu0 %v528
      %788 = vmatpush.msra.mxu0 %v527
      %789 = vmatpush.msra.mxu0 %v526
      %790 = vmatpush.msra.mxu0 %v525
      %791 = vmatmul.f32.gmra.mxu0 %v761
      %v792 = vpop.f32.mrf.mxu0
      %v793 = vadd.f32 0.0, %v792
      %794 = vmatmul.f32.gmra.mxu0 %v764
      %v795 = vpop.f32.mrf.mxu0
      %v796 = vadd.f32 0.0, %v795
      %797 = vmatmul.f32.gmra.mxu0 %v767
      %v798 = vpop.f32.mrf.mxu0
      %v799 = vadd.f32 0.0, %v798
      %800 = vmatmul.f32.gmra.mxu0 %v770
      %v801 = vpop.f32.mrf.mxu0
      %v802 = vadd.f32 0.0, %v801
      %803 = vmatmul.f32.gmra.mxu0 %v773
      %v804 = vpop.f32.mrf.mxu0
      %v805 = vadd.f32 0.0, %v804
      %806 = vdwg.mxu0
      %s807 = scalar_lea.vmem %s3, 64
      %v808 = vld [vmem:[%s807] sm:$0xff]
      %v809 = vld [vmem:[%s807 + $0x8] sm:$0xff]
      %v810 = vld [vmem:[%s807 + $0x10] sm:$0xff]
      %v811 = vld [vmem:[%s807 + $0x18] sm:$0xff]
      %v813 = vsel %vm272, %v793, 0
      %v816 = vsel %vm272, %v796, 0
      %v819 = vsel %vm272, %v799, 0
      %v822 = vsel %vm272, %v802, 0
      %v825 = vsel %vm272, %v805, 0
      %827 = vmatpush.msra.mxu0 0.0
      %828 = vmatpush.msra.mxu0 0.0
      %829 = vmatpush.msra.mxu0 0.0
      %830 = vmatpush.msra.mxu0 0.0
      %831 = vmatpush.msra.mxu0 0.0
      %832 = vmatpush.msra.mxu0 0.0
      %833 = vmatpush.msra.mxu0 0.0
      %834 = vmatpush.msra.mxu0 0.0
      %835 = vmatpush.msra.mxu0 0.0
      %836 = vmatpush.msra.mxu0 0.0
      %837 = vmatpush.msra.mxu0 0.0
      %838 = vmatpush.msra.mxu0 0.0
      %839 = vmatpush.msra.mxu0 %v811
      %840 = vmatpush.msra.mxu0 %v810
      %841 = vmatpush.msra.mxu0 %v809
      %842 = vmatpush.msra.mxu0 %v808
      %843 = vmatmul.f32.gmra.mxu0 %v813
      %v844 = vpop.f32.mrf.mxu0
      %v845 = vadd.f32 0.0, %v844
      %846 = vmatmul.f32.gmra.mxu0 %v816
      %v847 = vpop.f32.mrf.mxu0
      %v848 = vadd.f32 0.0, %v847
      %849 = vmatmul.f32.gmra.mxu0 %v819
      %v850 = vpop.f32.mrf.mxu0
      %v851 = vadd.f32 0.0, %v850
      %852 = vmatmul.f32.gmra.mxu0 %v822
      %v853 = vpop.f32.mrf.mxu0
      %v854 = vadd.f32 0.0, %v853
      %855 = vmatmul.f32.gmra.mxu0 %v825
      %v856 = vpop.f32.mrf.mxu0
      %v857 = vadd.f32 0.0, %v856
      %858 = vdwg.mxu0
      %v859 = vadd.f32 %v740, %v845
      %v860 = vadd.f32 %v743, %v848
      %v861 = vadd.f32 %v746, %v851
      %v862 = vadd.f32 %v749, %v854
      %v863 = vadd.f32 %v752, %v857
      %s864 = scalar_lea.vmem %s2, 120
      %v865 = vld [vmem:[%s864] sm:$0xff]
      %v866 = vld [vmem:[%s864 + $0x8] sm:$0xff]
      %v867 = vld [vmem:[%s864 + $0x10] sm:$0xff]
      %v868 = vld [vmem:[%s864 + $0x18] sm:$0xff]
      %v869 = vld [vmem:[%s864 + $0x20] sm:$0xf]
      %v871 = vsel %vm546, %v865, 0
      %v874 = vsel %vm546, %v866, 0
      %v877 = vsel %vm546, %v867, 0
      %v880 = vsel %vm546, %v868, 0
      %v883 = vsel %vm546, %v869, 0
      %885 = vmatpush.msra.mxu0 %v564
      %886 = vmatpush.msra.mxu0 %v539
      %887 = vmatpush.msra.mxu0 %v538
      %888 = vmatpush.msra.mxu0 %v537
      %889 = vmatpush.msra.mxu0 %v536
      %890 = vmatpush.msra.mxu0 %v535
      %891 = vmatpush.msra.mxu0 %v534
      %892 = vmatpush.msra.mxu0 %v533
      %893 = vmatpush.msra.mxu0 %v532
      %894 = vmatpush.msra.mxu0 %v531
      %895 = vmatpush.msra.mxu0 %v530
      %896 = vmatpush.msra.mxu0 %v529
      %897 = vmatpush.msra.mxu0 %v528
      %898 = vmatpush.msra.mxu0 %v527
      %899 = vmatpush.msra.mxu0 %v526
      %900 = vmatpush.msra.mxu0 %v525
      %901 = vmatmul.f32.gmra.mxu0 %v871
      %v902 = vpop.f32.mrf.mxu0
      %v903 = vadd.f32 0.0, %v902
      %904 = vmatmul.f32.gmra.mxu0 %v874
      %v905 = vpop.f32.mrf.mxu0
      %v906 = vadd.f32 0.0, %v905
      %907 = vmatmul.f32.gmra.mxu0 %v877
      %v908 = vpop.f32.mrf.mxu0
      %v909 = vadd.f32 0.0, %v908
      %910 = vmatmul.f32.gmra.mxu0 %v880
      %v911 = vpop.f32.mrf.mxu0
      %v912 = vadd.f32 0.0, %v911
      %913 = vmatmul.f32.gmra.mxu0 %v883
      %v914 = vpop.f32.mrf.mxu0
      %v915 = vadd.f32 0.0, %v914
      %916 = vdwg.mxu0
      %s917 = scalar_lea.vmem %s3, 96
      %v918 = vld [vmem:[%s917] sm:$0xff]
      %v919 = vld [vmem:[%s917 + $0x8] sm:$0xff]
      %v920 = vld [vmem:[%s917 + $0x10] sm:$0xff]
      %v921 = vld [vmem:[%s917 + $0x18] sm:$0xff]
      %v923 = vsel %vm272, %v903, 0
      %v926 = vsel %vm272, %v906, 0
      %v929 = vsel %vm272, %v909, 0
      %v932 = vsel %vm272, %v912, 0
      %v935 = vsel %vm272, %v915, 0
      %937 = vmatpush.msra.mxu0 0.0
      %938 = vmatpush.msra.mxu0 0.0
      %939 = vmatpush.msra.mxu0 0.0
      %940 = vmatpush.msra.mxu0 0.0
      %941 = vmatpush.msra.mxu0 0.0
      %942 = vmatpush.msra.mxu0 0.0
      %943 = vmatpush.msra.mxu0 0.0
      %944 = vmatpush.msra.mxu0 0.0
      %945 = vmatpush.msra.mxu0 0.0
      %946 = vmatpush.msra.mxu0 0.0
      %947 = vmatpush.msra.mxu0 0.0
      %948 = vmatpush.msra.mxu0 0.0
      %949 = vmatpush.msra.mxu0 %v921
      %950 = vmatpush.msra.mxu0 %v920
      %951 = vmatpush.msra.mxu0 %v919
      %952 = vmatpush.msra.mxu0 %v918
      %953 = vmatmul.f32.gmra.mxu0 %v923
      %v954 = vpop.f32.mrf.mxu0
      %v955 = vadd.f32 0.0, %v954
      %956 = vmatmul.f32.gmra.mxu0 %v926
      %v957 = vpop.f32.mrf.mxu0
      %v958 = vadd.f32 0.0, %v957
      %959 = vmatmul.f32.gmra.mxu0 %v929
      %v960 = vpop.f32.mrf.mxu0
      %v961 = vadd.f32 0.0, %v960
      %962 = vmatmul.f32.gmra.mxu0 %v932
      %v963 = vpop.f32.mrf.mxu0
      %v964 = vadd.f32 0.0, %v963
      %965 = vmatmul.f32.gmra.mxu0 %v935
      %v966 = vpop.f32.mrf.mxu0
      %v967 = vadd.f32 0.0, %v966
      %968 = vdwg.mxu0
      %v969 = vadd.f32 %v859, %v955
      %v970 = vadd.f32 %v860, %v958
      %v971 = vadd.f32 %v861, %v961
      %v972 = vadd.f32 %v862, %v964
      %v973 = vadd.f32 %v863, %v967
      %s974 = scalar_lea.vmem %s2, 160
      %v975 = vld [vmem:[%s974] sm:$0xff]
      %v976 = vld [vmem:[%s974 + $0x8] sm:$0xff]
      %v977 = vld [vmem:[%s974 + $0x10] sm:$0xff]
      %v978 = vld [vmem:[%s974 + $0x18] sm:$0xff]
      %v979 = vld [vmem:[%s974 + $0x20] sm:$0xf]
      %v981 = vsel %vm546, %v975, 0
      %v984 = vsel %vm546, %v976, 0
      %v987 = vsel %vm546, %v977, 0
      %v990 = vsel %vm546, %v978, 0
      %v993 = vsel %vm546, %v979, 0
      %995 = vmatpush.msra.mxu0 %v564
      %996 = vmatpush.msra.mxu0 %v539
      %997 = vmatpush.msra.mxu0 %v538
      %998 = vmatpush.msra.mxu0 %v537
      %999 = vmatpush.msra.mxu0 %v536
      %1000 = vmatpush.msra.mxu0 %v535
      %1001 = vmatpush.msra.mxu0 %v534
      %1002 = vmatpush.msra.mxu0 %v533
      %1003 = vmatpush.msra.mxu0 %v532
      %1004 = vmatpush.msra.mxu0 %v531
      %1005 = vmatpush.msra.mxu0 %v530
      %1006 = vmatpush.msra.mxu0 %v529
      %1007 = vmatpush.msra.mxu0 %v528
      %1008 = vmatpush.msra.mxu0 %v527
      %1009 = vmatpush.msra.mxu0 %v526
      %1010 = vmatpush.msra.mxu0 %v525
      %1011 = vmatmul.f32.gmra.mxu0 %v981
      %v1012 = vpop.f32.mrf.mxu0
      %v1013 = vadd.f32 0.0, %v1012
      %1014 = vmatmul.f32.gmra.mxu0 %v984
      %v1015 = vpop.f32.mrf.mxu0
      %v1016 = vadd.f32 0.0, %v1015
      %1017 = vmatmul.f32.gmra.mxu0 %v987
      %v1018 = vpop.f32.mrf.mxu0
      %v1019 = vadd.f32 0.0, %v1018
      %1020 = vmatmul.f32.gmra.mxu0 %v990
      %v1021 = vpop.f32.mrf.mxu0
      %v1022 = vadd.f32 0.0, %v1021
      %1023 = vmatmul.f32.gmra.mxu0 %v993
      %v1024 = vpop.f32.mrf.mxu0
      %v1025 = vadd.f32 0.0, %v1024
      %1026 = vdwg.mxu0
      %s1027 = scalar_lea.vmem %s3, 128
      %v1028 = vld [vmem:[%s1027] sm:$0xff]
      %v1029 = vld [vmem:[%s1027 + $0x8] sm:$0xff]
      %v1030 = vld [vmem:[%s1027 + $0x10] sm:$0xff]
      %v1031 = vld [vmem:[%s1027 + $0x18] sm:$0xff]
      %v1033 = vsel %vm272, %v1013, 0
      %v1036 = vsel %vm272, %v1016, 0
      %v1039 = vsel %vm272, %v1019, 0
      %v1042 = vsel %vm272, %v1022, 0
      %v1045 = vsel %vm272, %v1025, 0
      %1047 = vmatpush.msra.mxu0 0.0
      %1048 = vmatpush.msra.mxu0 0.0
      %1049 = vmatpush.msra.mxu0 0.0
      %1050 = vmatpush.msra.mxu0 0.0
      %1051 = vmatpush.msra.mxu0 0.0
      %1052 = vmatpush.msra.mxu0 0.0
      %1053 = vmatpush.msra.mxu0 0.0
      %1054 = vmatpush.msra.mxu0 0.0
      %1055 = vmatpush.msra.mxu0 0.0
      %1056 = vmatpush.msra.mxu0 0.0
      %1057 = vmatpush.msra.mxu0 0.0
      %1058 = vmatpush.msra.mxu0 0.0
      %1059 = vmatpush.msra.mxu0 %v1031
      %1060 = vmatpush.msra.mxu0 %v1030
      %1061 = vmatpush.msra.mxu0 %v1029
      %1062 = vmatpush.msra.mxu0 %v1028
      %1063 = vmatmul.f32.gmra.mxu0 %v1033
      %v1064 = vpop.f32.mrf.mxu0
      %v1065 = vadd.f32 0.0, %v1064
      %1066 = vmatmul.f32.gmra.mxu0 %v1036
      %v1067 = vpop.f32.mrf.mxu0
      %v1068 = vadd.f32 0.0, %v1067
      %1069 = vmatmul.f32.gmra.mxu0 %v1039
      %v1070 = vpop.f32.mrf.mxu0
      %v1071 = vadd.f32 0.0, %v1070
      %1072 = vmatmul.f32.gmra.mxu0 %v1042
      %v1073 = vpop.f32.mrf.mxu0
      %v1074 = vadd.f32 0.0, %v1073
      %1075 = vmatmul.f32.gmra.mxu0 %v1045
      %v1076 = vpop.f32.mrf.mxu0
      %v1077 = vadd.f32 0.0, %v1076
      %1078 = vdwg.mxu0
      %v1079 = vadd.f32 %v969, %v1065
      %v1080 = vadd.f32 %v970, %v1068
      %v1081 = vadd.f32 %v971, %v1071
      %v1082 = vadd.f32 %v972, %v1074
      %v1083 = vadd.f32 %v973, %v1077
      %s1084 = scalar_lea.vmem %s2, 200
      %v1085 = vld [vmem:[%s1084] sm:$0xff]
      %v1086 = vld [vmem:[%s1084 + $0x8] sm:$0xff]
      %v1087 = vld [vmem:[%s1084 + $0x10] sm:$0xff]
      %v1088 = vld [vmem:[%s1084 + $0x18] sm:$0xff]
      %v1089 = vld [vmem:[%s1084 + $0x20] sm:$0xf]
      %v1091 = vsel %vm546, %v1085, 0
      %v1094 = vsel %vm546, %v1086, 0
      %v1097 = vsel %vm546, %v1087, 0
      %v1100 = vsel %vm546, %v1088, 0
      %v1103 = vsel %vm546, %v1089, 0
      %1105 = vmatpush.msra.mxu0 %v564
      %1106 = vmatpush.msra.mxu0 %v539
      %1107 = vmatpush.msra.mxu0 %v538
      %1108 = vmatpush.msra.mxu0 %v537
      %1109 = vmatpush.msra.mxu0 %v536
      %1110 = vmatpush.msra.mxu0 %v535
      %1111 = vmatpush.msra.mxu0 %v534
      %1112 = vmatpush.msra.mxu0 %v533
      %1113 = vmatpush.msra.mxu0 %v532
      %1114 = vmatpush.msra.mxu0 %v531
      %1115 = vmatpush.msra.mxu0 %v530
      %1116 = vmatpush.msra.mxu0 %v529
      %1117 = vmatpush.msra.mxu0 %v528
      %1118 = vmatpush.msra.mxu0 %v527
      %1119 = vmatpush.msra.mxu0 %v526
      %1120 = vmatpush.msra.mxu0 %v525
      %1121 = vmatmul.f32.gmra.mxu0 %v1091
      %v1122 = vpop.f32.mrf.mxu0
      %v1123 = vadd.f32 0.0, %v1122
      %1124 = vmatmul.f32.gmra.mxu0 %v1094
      %v1125 = vpop.f32.mrf.mxu0
      %v1126 = vadd.f32 0.0, %v1125
      %1127 = vmatmul.f32.gmra.mxu0 %v1097
      %v1128 = vpop.f32.mrf.mxu0
      %v1129 = vadd.f32 0.0, %v1128
      %1130 = vmatmul.f32.gmra.mxu0 %v1100
      %v1131 = vpop.f32.mrf.mxu0
      %v1132 = vadd.f32 0.0, %v1131
      %1133 = vmatmul.f32.gmra.mxu0 %v1103
      %v1134 = vpop.f32.mrf.mxu0
      %v1135 = vadd.f32 0.0, %v1134
      %1136 = vdwg.mxu0
      %s1137 = scalar_lea.vmem %s3, 160
      %v1138 = vld [vmem:[%s1137] sm:$0xff]
      %v1139 = vld [vmem:[%s1137 + $0x8] sm:$0xff]
      %v1140 = vld [vmem:[%s1137 + $0x10] sm:$0xff]
      %v1141 = vld [vmem:[%s1137 + $0x18] sm:$0xff]
      %v1143 = vsel %vm272, %v1123, 0
      %v1146 = vsel %vm272, %v1126, 0
      %v1149 = vsel %vm272, %v1129, 0
      %v1152 = vsel %vm272, %v1132, 0
      %v1155 = vsel %vm272, %v1135, 0
      %1157 = vmatpush.msra.mxu0 0.0
      %1158 = vmatpush.msra.mxu0 0.0
      %1159 = vmatpush.msra.mxu0 0.0
      %1160 = vmatpush.msra.mxu0 0.0
      %1161 = vmatpush.msra.mxu0 0.0
      %1162 = vmatpush.msra.mxu0 0.0
      %1163 = vmatpush.msra.mxu0 0.0
      %1164 = vmatpush.msra.mxu0 0.0
      %1165 = vmatpush.msra.mxu0 0.0
      %1166 = vmatpush.msra.mxu0 0.0
      %1167 = vmatpush.msra.mxu0 0.0
      %1168 = vmatpush.msra.mxu0 0.0
      %1169 = vmatpush.msra.mxu0 %v1141
      %1170 = vmatpush.msra.mxu0 %v1140
      %1171 = vmatpush.msra.mxu0 %v1139
      %1172 = vmatpush.msra.mxu0 %v1138
      %1173 = vmatmul.f32.gmra.mxu0 %v1143
      %v1174 = vpop.f32.mrf.mxu0
      %v1175 = vadd.f32 0.0, %v1174
      %1176 = vmatmul.f32.gmra.mxu0 %v1146
      %v1177 = vpop.f32.mrf.mxu0
      %v1178 = vadd.f32 0.0, %v1177
      %1179 = vmatmul.f32.gmra.mxu0 %v1149
      %v1180 = vpop.f32.mrf.mxu0
      %v1181 = vadd.f32 0.0, %v1180
      %1182 = vmatmul.f32.gmra.mxu0 %v1152
      %v1183 = vpop.f32.mrf.mxu0
      %v1184 = vadd.f32 0.0, %v1183
      %1185 = vmatmul.f32.gmra.mxu0 %v1155
      %v1186 = vpop.f32.mrf.mxu0
      %v1187 = vadd.f32 0.0, %v1186
      %1188 = vdwg.mxu0
      %v1189 = vadd.f32 %v1079, %v1175
      %v1190 = vadd.f32 %v1080, %v1178
      %v1191 = vadd.f32 %v1081, %v1181
      %v1192 = vadd.f32 %v1082, %v1184
      %v1193 = vadd.f32 %v1083, %v1187
      %s1194 = scalar_lea.vmem %s2, 240
      %v1195 = vld [vmem:[%s1194] sm:$0xff]
      %v1196 = vld [vmem:[%s1194 + $0x8] sm:$0xff]
      %v1197 = vld [vmem:[%s1194 + $0x10] sm:$0xff]
      %v1198 = vld [vmem:[%s1194 + $0x18] sm:$0xff]
      %v1199 = vld [vmem:[%s1194 + $0x20] sm:$0xf]
      %v1201 = vsel %vm546, %v1195, 0
      %v1204 = vsel %vm546, %v1196, 0
      %v1207 = vsel %vm546, %v1197, 0
      %v1210 = vsel %vm546, %v1198, 0
      %v1213 = vsel %vm546, %v1199, 0
      %1215 = vmatpush.msra.mxu0 %v564
      %1216 = vmatpush.msra.mxu0 %v539
      %1217 = vmatpush.msra.mxu0 %v538
      %1218 = vmatpush.msra.mxu0 %v537
      %1219 = vmatpush.msra.mxu0 %v536
      %1220 = vmatpush.msra.mxu0 %v535
      %1221 = vmatpush.msra.mxu0 %v534
      %1222 = vmatpush.msra.mxu0 %v533
      %1223 = vmatpush.msra.mxu0 %v532
      %1224 = vmatpush.msra.mxu0 %v531
      %1225 = vmatpush.msra.mxu0 %v530
      %1226 = vmatpush.msra.mxu0 %v529
      %1227 = vmatpush.msra.mxu0 %v528
      %1228 = vmatpush.msra.mxu0 %v527
      %1229 = vmatpush.msra.mxu0 %v526
      %1230 = vmatpush.msra.mxu0 %v525
      %1231 = vmatmul.f32.gmra.mxu0 %v1201
      %v1232 = vpop.f32.mrf.mxu0
      %v1233 = vadd.f32 0.0, %v1232
      %1234 = vmatmul.f32.gmra.mxu0 %v1204
      %v1235 = vpop.f32.mrf.mxu0
      %v1236 = vadd.f32 0.0, %v1235
      %1237 = vmatmul.f32.gmra.mxu0 %v1207
      %v1238 = vpop.f32.mrf.mxu0
      %v1239 = vadd.f32 0.0, %v1238
      %1240 = vmatmul.f32.gmra.mxu0 %v1210
      %v1241 = vpop.f32.mrf.mxu0
      %v1242 = vadd.f32 0.0, %v1241
      %1243 = vmatmul.f32.gmra.mxu0 %v1213
      %v1244 = vpop.f32.mrf.mxu0
      %v1245 = vadd.f32 0.0, %v1244
      %1246 = vdwg.mxu0
      %s1247 = scalar_lea.vmem %s3, 192
      %v1248 = vld [vmem:[%s1247] sm:$0xff]
      %v1249 = vld [vmem:[%s1247 + $0x8] sm:$0xff]
      %v1250 = vld [vmem:[%s1247 + $0x10] sm:$0xff]
      %v1251 = vld [vmem:[%s1247 + $0x18] sm:$0xff]
      %v1253 = vsel %vm272, %v1233, 0
      %v1256 = vsel %vm272, %v1236, 0
      %v1259 = vsel %vm272, %v1239, 0
      %v1262 = vsel %vm272, %v1242, 0
      %v1265 = vsel %vm272, %v1245, 0
      %1267 = vmatpush.msra.mxu0 0.0
      %1268 = vmatpush.msra.mxu0 0.0
      %1269 = vmatpush.msra.mxu0 0.0
      %1270 = vmatpush.msra.mxu0 0.0
      %1271 = vmatpush.msra.mxu0 0.0
      %1272 = vmatpush.msra.mxu0 0.0
      %1273 = vmatpush.msra.mxu0 0.0
      %1274 = vmatpush.msra.mxu0 0.0
      %1275 = vmatpush.msra.mxu0 0.0
      %1276 = vmatpush.msra.mxu0 0.0
      %1277 = vmatpush.msra.mxu0 0.0
      %1278 = vmatpush.msra.mxu0 0.0
      %1279 = vmatpush.msra.mxu0 %v1251
      %1280 = vmatpush.msra.mxu0 %v1250
      %1281 = vmatpush.msra.mxu0 %v1249
      %1282 = vmatpush.msra.mxu0 %v1248
      %1283 = vmatmul.f32.gmra.mxu0 %v1253
      %v1284 = vpop.f32.mrf.mxu0
      %v1285 = vadd.f32 0.0, %v1284
      %1286 = vmatmul.f32.gmra.mxu0 %v1256
      %v1287 = vpop.f32.mrf.mxu0
      %v1288 = vadd.f32 0.0, %v1287
      %1289 = vmatmul.f32.gmra.mxu0 %v1259
      %v1290 = vpop.f32.mrf.mxu0
      %v1291 = vadd.f32 0.0, %v1290
      %1292 = vmatmul.f32.gmra.mxu0 %v1262
      %v1293 = vpop.f32.mrf.mxu0
      %v1294 = vadd.f32 0.0, %v1293
      %1295 = vmatmul.f32.gmra.mxu0 %v1265
      %v1296 = vpop.f32.mrf.mxu0
      %v1297 = vadd.f32 0.0, %v1296
      %1298 = vdwg.mxu0
      %v1299 = vadd.f32 %v1189, %v1285
      %v1300 = vadd.f32 %v1190, %v1288
      %v1301 = vadd.f32 %v1191, %v1291
      %v1302 = vadd.f32 %v1192, %v1294
      %v1303 = vadd.f32 %v1193, %v1297
      %s1304 = scalar_lea.vmem %s2, 280
      %v1305 = vld [vmem:[%s1304] sm:$0xff]
      %v1306 = vld [vmem:[%s1304 + $0x8] sm:$0xff]
      %v1307 = vld [vmem:[%s1304 + $0x10] sm:$0xff]
      %v1308 = vld [vmem:[%s1304 + $0x18] sm:$0xff]
      %v1309 = vld [vmem:[%s1304 + $0x20] sm:$0xf]
      %v1311 = vsel %vm546, %v1305, 0
      %v1314 = vsel %vm546, %v1306, 0
      %v1317 = vsel %vm546, %v1307, 0
      %v1320 = vsel %vm546, %v1308, 0
      %v1323 = vsel %vm546, %v1309, 0
      %1325 = vmatpush.msra.mxu0 %v564
      %1326 = vmatpush.msra.mxu0 %v539
      %1327 = vmatpush.msra.mxu0 %v538
      %1328 = vmatpush.msra.mxu0 %v537
      %1329 = vmatpush.msra.mxu0 %v536
      %1330 = vmatpush.msra.mxu0 %v535
      %1331 = vmatpush.msra.mxu0 %v534
      %1332 = vmatpush.msra.mxu0 %v533
      %1333 = vmatpush.msra.mxu0 %v532
      %1334 = vmatpush.msra.mxu0 %v531
      %1335 = vmatpush.msra.mxu0 %v530
      %1336 = vmatpush.msra.mxu0 %v529
      %1337 = vmatpush.msra.mxu0 %v528
      %1338 = vmatpush.msra.mxu0 %v527
      %1339 = vmatpush.msra.mxu0 %v526
      %1340 = vmatpush.msra.mxu0 %v525
      %1341 = vmatmul.f32.gmra.mxu0 %v1311
      %v1342 = vpop.f32.mrf.mxu0
      %v1343 = vadd.f32 0.0, %v1342
      %1344 = vmatmul.f32.gmra.mxu0 %v1314
      %v1345 = vpop.f32.mrf.mxu0
      %v1346 = vadd.f32 0.0, %v1345
      %1347 = vmatmul.f32.gmra.mxu0 %v1317
      %v1348 = vpop.f32.mrf.mxu0
      %v1349 = vadd.f32 0.0, %v1348
      %1350 = vmatmul.f32.gmra.mxu0 %v1320
      %v1351 = vpop.f32.mrf.mxu0
      %v1352 = vadd.f32 0.0, %v1351
      %1353 = vmatmul.f32.gmra.mxu0 %v1323
      %v1354 = vpop.f32.mrf.mxu0
      %v1355 = vadd.f32 0.0, %v1354
      %1356 = vdwg.mxu0
      %s1357 = scalar_lea.vmem %s3, 224
      %v1358 = vld [vmem:[%s1357] sm:$0xff]
      %v1359 = vld [vmem:[%s1357 + $0x8] sm:$0xff]
      %v1360 = vld [vmem:[%s1357 + $0x10] sm:$0xff]
      %v1361 = vld [vmem:[%s1357 + $0x18] sm:$0xff]
      %v1363 = vsel %vm272, %v1343, 0
      %v1366 = vsel %vm272, %v1346, 0
      %v1369 = vsel %vm272, %v1349, 0
      %v1372 = vsel %vm272, %v1352, 0
      %v1375 = vsel %vm272, %v1355, 0
      %1377 = vmatpush.msra.mxu0 0.0
      %1378 = vmatpush.msra.mxu0 0.0
      %1379 = vmatpush.msra.mxu0 0.0
      %1380 = vmatpush.msra.mxu0 0.0
      %1381 = vmatpush.msra.mxu0 0.0
      %1382 = vmatpush.msra.mxu0 0.0
      %1383 = vmatpush.msra.mxu0 0.0
      %1384 = vmatpush.msra.mxu0 0.0
      %1385 = vmatpush.msra.mxu0 0.0
      %1386 = vmatpush.msra.mxu0 0.0
      %1387 = vmatpush.msra.mxu0 0.0
      %1388 = vmatpush.msra.mxu0 0.0
      %1389 = vmatpush.msra.mxu0 %v1361
      %1390 = vmatpush.msra.mxu0 %v1360
      %1391 = vmatpush.msra.mxu0 %v1359
      %1392 = vmatpush.msra.mxu0 %v1358
      %1393 = vmatmul.f32.gmra.mxu0 %v1363
      %v1394 = vpop.f32.mrf.mxu0
      %v1395 = vadd.f32 0.0, %v1394
      %1396 = vmatmul.f32.gmra.mxu0 %v1366
      %v1397 = vpop.f32.mrf.mxu0
      %v1398 = vadd.f32 0.0, %v1397
      %1399 = vmatmul.f32.gmra.mxu0 %v1369
      %v1400 = vpop.f32.mrf.mxu0
      %v1401 = vadd.f32 0.0, %v1400
      %1402 = vmatmul.f32.gmra.mxu0 %v1372
      %v1403 = vpop.f32.mrf.mxu0
      %v1404 = vadd.f32 0.0, %v1403
      %1405 = vmatmul.f32.gmra.mxu0 %v1375
      %v1406 = vpop.f32.mrf.mxu0
      %v1407 = vadd.f32 0.0, %v1406
      %1408 = vdwg.mxu0
      %v1409 = vadd.f32 %v1299, %v1395
      %v1410 = vadd.f32 %v1300, %v1398
      %v1411 = vadd.f32 %v1301, %v1401
      %v1412 = vadd.f32 %v1302, %v1404
      %v1413 = vadd.f32 %v1303, %v1407
      %s1414 = scalar_lea.vmem %s2, 320
      %v1415 = vld [vmem:[%s1414] sm:$0xff]
      %v1416 = vld [vmem:[%s1414 + $0x8] sm:$0xff]
      %v1417 = vld [vmem:[%s1414 + $0x10] sm:$0xff]
      %v1418 = vld [vmem:[%s1414 + $0x18] sm:$0xff]
      %v1419 = vld [vmem:[%s1414 + $0x20] sm:$0xf]
      %v1421 = vsel %vm546, %v1415, 0
      %v1424 = vsel %vm546, %v1416, 0
      %v1427 = vsel %vm546, %v1417, 0
      %v1430 = vsel %vm546, %v1418, 0
      %v1433 = vsel %vm546, %v1419, 0
      %1435 = vmatpush.msra.mxu0 %v564
      %1436 = vmatpush.msra.mxu0 %v539
      %1437 = vmatpush.msra.mxu0 %v538
      %1438 = vmatpush.msra.mxu0 %v537
      %1439 = vmatpush.msra.mxu0 %v536
      %1440 = vmatpush.msra.mxu0 %v535
      %1441 = vmatpush.msra.mxu0 %v534
      %1442 = vmatpush.msra.mxu0 %v533
      %1443 = vmatpush.msra.mxu0 %v532
      %1444 = vmatpush.msra.mxu0 %v531
      %1445 = vmatpush.msra.mxu0 %v530
      %1446 = vmatpush.msra.mxu0 %v529
      %1447 = vmatpush.msra.mxu0 %v528
      %1448 = vmatpush.msra.mxu0 %v527
      %1449 = vmatpush.msra.mxu0 %v526
      %1450 = vmatpush.msra.mxu0 %v525
      %1451 = vmatmul.f32.gmra.mxu0 %v1421
      %v1452 = vpop.f32.mrf.mxu0
      %v1453 = vadd.f32 0.0, %v1452
      %1454 = vmatmul.f32.gmra.mxu0 %v1424
      %v1455 = vpop.f32.mrf.mxu0
      %v1456 = vadd.f32 0.0, %v1455
      %1457 = vmatmul.f32.gmra.mxu0 %v1427
      %v1458 = vpop.f32.mrf.mxu0
      %v1459 = vadd.f32 0.0, %v1458
      %1460 = vmatmul.f32.gmra.mxu0 %v1430
      %v1461 = vpop.f32.mrf.mxu0
      %v1462 = vadd.f32 0.0, %v1461
      %1463 = vmatmul.f32.gmra.mxu0 %v1433
      %v1464 = vpop.f32.mrf.mxu0
      %v1465 = vadd.f32 0.0, %v1464
      %1466 = vdwg.mxu0
      %s1467 = scalar_lea.vmem %s3, 256
      %v1468 = vld [vmem:[%s1467] sm:$0xff]
      %v1469 = vld [vmem:[%s1467 + $0x8] sm:$0xff]
      %v1470 = vld [vmem:[%s1467 + $0x10] sm:$0xff]
      %v1471 = vld [vmem:[%s1467 + $0x18] sm:$0xff]
      %v1473 = vsel %vm272, %v1453, 0
      %v1476 = vsel %vm272, %v1456, 0
      %v1479 = vsel %vm272, %v1459, 0
      %v1482 = vsel %vm272, %v1462, 0
      %v1485 = vsel %vm272, %v1465, 0
      %1487 = vmatpush.msra.mxu0 0.0
      %1488 = vmatpush.msra.mxu0 0.0
      %1489 = vmatpush.msra.mxu0 0.0
      %1490 = vmatpush.msra.mxu0 0.0
      %1491 = vmatpush.msra.mxu0 0.0
      %1492 = vmatpush.msra.mxu0 0.0
      %1493 = vmatpush.msra.mxu0 0.0
      %1494 = vmatpush.msra.mxu0 0.0
      %1495 = vmatpush.msra.mxu0 0.0
      %1496 = vmatpush.msra.mxu0 0.0
      %1497 = vmatpush.msra.mxu0 0.0
      %1498 = vmatpush.msra.mxu0 0.0
      %1499 = vmatpush.msra.mxu0 %v1471
      %1500 = vmatpush.msra.mxu0 %v1470
      %1501 = vmatpush.msra.mxu0 %v1469
      %1502 = vmatpush.msra.mxu0 %v1468
      %1503 = vmatmul.f32.gmra.mxu0 %v1473
      %v1504 = vpop.f32.mrf.mxu0
      %v1505 = vadd.f32 0.0, %v1504
      %1506 = vmatmul.f32.gmra.mxu0 %v1476
      %v1507 = vpop.f32.mrf.mxu0
      %v1508 = vadd.f32 0.0, %v1507
      %1509 = vmatmul.f32.gmra.mxu0 %v1479
      %v1510 = vpop.f32.mrf.mxu0
      %v1511 = vadd.f32 0.0, %v1510
      %1512 = vmatmul.f32.gmra.mxu0 %v1482
      %v1513 = vpop.f32.mrf.mxu0
      %v1514 = vadd.f32 0.0, %v1513
      %1515 = vmatmul.f32.gmra.mxu0 %v1485
      %v1516 = vpop.f32.mrf.mxu0
      %v1517 = vadd.f32 0.0, %v1516
      %1518 = vdwg.mxu0
      %v1519 = vadd.f32 %v1409, %v1505
      %v1520 = vadd.f32 %v1410, %v1508
      %v1521 = vadd.f32 %v1411, %v1511
      %v1522 = vadd.f32 %v1412, %v1514
      %v1523 = vadd.f32 %v1413, %v1517
      %vm1524 = vcmask 523264
      %v1525 = vsel %vm1524, %v1519, 0.0
      %v1526 = vsel %vm1524, %v1520, 0.0
      %v1527 = vadd.f32 %v1525, %v1526
      %v1528 = vsel %vm1524, %v1521, 0.0
      %v1529 = vadd.f32 %v1527, %v1528
      %v1530 = vsel %vm1524, %v1522, 0.0
      %v1531 = vadd.f32 %v1529, %v1530
      %vm1532 = vcmask 519168
      %v1533 = vsel %vm1532, %v1523, 0.0
      %v1534 = vadd.f32 %v1531, %v1533
      %v1535 = vrot.slane %v1534, 4
      %v1536 = vadd.f32 %v1534, %v1535
      %v1537 = vrot.slane %v1536, 2
      %v1538 = vadd.f32 %v1536, %v1537
      %v1539 = vrot.slane %v1538, 1
      %v1540 = vadd.f32 %v1538, %v1539
      %v1541 = vmul.f32 %v1519, %v1519
      %v1542 = vmul.f32 %v1520, %v1520
      %v1543 = vmul.f32 %v1521, %v1521
      %v1544 = vmul.f32 %v1522, %v1522
      %v1545 = vmul.f32 %v1523, %v1523
      %v1546 = vsel %vm1524, %v1541, 0.0
      %v1547 = vsel %vm1524, %v1542, 0.0
      %v1548 = vadd.f32 %v1546, %v1547
      %v1549 = vsel %vm1524, %v1543, 0.0
      %v1550 = vadd.f32 %v1548, %v1549
      %v1551 = vsel %vm1524, %v1544, 0.0
      %v1552 = vadd.f32 %v1550, %v1551
      %v1553 = vsel %vm1532, %v1545, 0.0
      %v1554 = vadd.f32 %v1552, %v1553
      %v1555 = vrot.slane %v1554, 4
      %v1556 = vadd.f32 %v1554, %v1555
      %v1557 = vrot.slane %v1556, 2
      %v1558 = vadd.f32 %v1556, %v1557
      %v1559 = vrot.slane %v1558, 1
      %v1560 = vadd.f32 %v1558, %v1559
      %v1561 = vmul.f32 %v1540, 0.027777778
      %v1562 = vmul.f32 %v1560, 0.027777778
      %v1563 = vmul.f32 %v1561, %v1561
      %v1564 = vsub.f32 %v1562, %v1563
      %v1565 = vmax.f32 %v1564, 0.0
      %v1566 = vadd.f32 %v1565, 1e-05
      %v1567 = vrsqrt.pop %v1566
      %v1568 = vmul.f32 %v1567, %v1566
      %v1569 = vmul.f32 %v1568, %v1567
      %v1570 = vmul.f32 0.5, %v1569
      %v1571 = vsub.f32 1.5, %v1570
      %v1572 = vmul.f32 %v1567, %v1571
      %vm1573 = vweird.f32 %v1566
      %vm1574 = vweird.f32 %v1567
      %vm1575 = vmor %vm1573, %vm1574
      %v1576 = vsel %vm1575, %v1567, %v1572
      %v1577 = vsub.f32 %v1519, %v1561
      %v1578 = vsub.f32 %v1520, %v1561
      %v1579 = vsub.f32 %v1521, %v1561
      %v1580 = vsub.f32 %v1522, %v1561
      %v1581 = vsub.f32 %v1523, %v1561
      %v1582 = vmul.f32 %v1577, %v1576
      %v1583 = vmul.f32 %v1578, %v1576
      %v1584 = vmul.f32 %v1579, %v1576
      %v1585 = vmul.f32 %v1580, %v1576
      %v1586 = vmul.f32 %v1581, %v1576
      %v1587 = vmax.f32 %v1582, 0.0
      %v1588 = vmax.f32 %v1583, 0.0
      %v1589 = vmax.f32 %v1584, 0.0
      %v1590 = vmax.f32 %v1585, 0.0
      %v1591 = vmax.f32 %v1586, 0.0
      %v1592 = vld [vmem:[%s4] sm:$0xff]
      %v1593 = vld [vmem:[%s4 + $0x8] sm:$0x1]
      %vm1594 = vcmask 293888
      %v1596 = vsel %vm1594, %v1592, 0
      %v1599 = vsel %vm1594, %v1593, 0
      %vm1601 = vcmask 1043456
      %v1603 = vsel %vm1601, %v1591, 0
      %1605 = vmatpush.msra.mxu0 0.0
      %1606 = vmatpush.msra.mxu0 0.0
      %1607 = vmatpush.msra.mxu0 0.0
      %1608 = vmatpush.msra.mxu0 0.0
      %1609 = vmatpush.msra.mxu0 0.0
      %1610 = vmatpush.msra.mxu0 0.0
      %1611 = vmatpush.msra.mxu0 0.0
      %1612 = vmatpush.msra.mxu0 0.0
      %1613 = vmatpush.msra.mxu0 0.0
      %1614 = vmatpush.msra.mxu0 0.0
      %1615 = vmatpush.msra.mxu0 0.0
      %1616 = vmatpush.msra.mxu0 %v1603
      %1617 = vmatpush.msra.mxu0 %v1590
      %1618 = vmatpush.msra.mxu0 %v1589
      %1619 = vmatpush.msra.mxu0 %v1588
      %1620 = vmatpush.msra.mxu0 %v1587
      %1621 = vmatmul.f32.gmra.mxu0 %v1596
      %v1622 = vpop.f32.mrf.mxu0
      %v1623 = vadd.f32 0.0, %v1622
      %1624 = vmatmul.f32.gmra.mxu0 %v1599
      %v1625 = vpop.f32.mrf.mxu0
      %v1626 = vadd.f32 0.0, %v1625
      %1627 = vdwg.mxu0
      %v1628 = vld [vmem:[%s5] sm:$0xff]
      %v1629 = vld [vmem:[%s5 + $0x8] sm:$0xff]
      %v1630 = vld [vmem:[%s5 + $0x10] sm:$0xff]
      %v1631 = vld [vmem:[%s5 + $0x18] sm:$0xff]
      %v1632 = vld [vmem:[%s5 + $0x20] sm:$0xff]
      %v1633 = vld [vmem:[%s5 + $0x28] sm:$0xff]
      %v1634 = vld [vmem:[%s5 + $0x30] sm:$0xff]
      %v1635 = vld [vmem:[%s5 + $0x38] sm:$0xff]
      %s1636 = scalar_lea.vmem %s4, 16
      %v1637 = vld [vmem:[%s1636] sm:$0xff]
      %v1638 = vld [vmem:[%s1636 + $0x8] sm:$0x1]
      %v1640 = vsel %vm1594, %v1637, 0
      %v1643 = vsel %vm1594, %v1638, 0
      %1645 = vmatpush.msra.mxu0 0.0
      %1646 = vmatpush.msra.mxu0 0.0
      %1647 = vmatpush.msra.mxu0 0.0
      %1648 = vmatpush.msra.mxu0 0.0
      %1649 = vmatpush.msra.mxu0 0.0
      %1650 = vmatpush.msra.mxu0 0.0
      %1651 = vmatpush.msra.mxu0 0.0
      %1652 = vmatpush.msra.mxu0 0.0
      %1653 = vmatpush.msra.mxu0 0.0
      %1654 = vmatpush.msra.mxu0 0.0
      %1655 = vmatpush.msra.mxu0 0.0
      %1656 = vmatpush.msra.mxu0 %v1603
      %1657 = vmatpush.msra.mxu0 %v1590
      %1658 = vmatpush.msra.mxu0 %v1589
      %1659 = vmatpush.msra.mxu0 %v1588
      %1660 = vmatpush.msra.mxu0 %v1587
      %1661 = vmatmul.f32.gmra.mxu0 %v1640
      %v1662 = vpop.f32.mrf.mxu0
      %v1663 = vadd.f32 0.0, %v1662
      %1664 = vmatmul.f32.gmra.mxu0 %v1643
      %v1665 = vpop.f32.mrf.mxu0
      %v1666 = vadd.f32 0.0, %v1665
      %1667 = vdwg.mxu0
      %s1668 = scalar_lea.vmem %s5, 64
      %v1669 = vld [vmem:[%s1668] sm:$0xff]
      %v1670 = vld [vmem:[%s1668 + $0x8] sm:$0xff]
      %v1671 = vld [vmem:[%s1668 + $0x10] sm:$0xff]
      %v1672 = vld [vmem:[%s1668 + $0x18] sm:$0xff]
      %v1673 = vld [vmem:[%s1668 + $0x20] sm:$0xff]
      %v1674 = vld [vmem:[%s1668 + $0x28] sm:$0xff]
      %v1675 = vld [vmem:[%s1668 + $0x30] sm:$0xff]
      %v1676 = vld [vmem:[%s1668 + $0x38] sm:$0xff]
      %v1678 = vsel %vm1524, %v1663, 0
      %v1681 = vsel %vm1524, %v1666, 0
      %1683 = vmatpush.msra.mxu0 0.0
      %1684 = vmatpush.msra.mxu0 0.0
      %1685 = vmatpush.msra.mxu0 0.0
      %1686 = vmatpush.msra.mxu0 0.0
      %1687 = vmatpush.msra.mxu0 0.0
      %1688 = vmatpush.msra.mxu0 0.0
      %1689 = vmatpush.msra.mxu0 0.0
      %1690 = vmatpush.msra.mxu0 0.0
      %1691 = vmatpush.msra.mxu0 %v1676
      %1692 = vmatpush.msra.mxu0 %v1675
      %1693 = vmatpush.msra.mxu0 %v1674
      %1694 = vmatpush.msra.mxu0 %v1673
      %1695 = vmatpush.msra.mxu0 %v1672
      %1696 = vmatpush.msra.mxu0 %v1671
      %1697 = vmatpush.msra.mxu0 %v1670
      %1698 = vmatpush.msra.mxu0 %v1669
      %1699 = vmatmul.f32.gmra.mxu0 %v1678
      %v1700 = vpop.f32.mrf.mxu0
      %v1701 = vadd.f32 0.0, %v1700
      %1702 = vmatmul.f32.gmra.mxu0 %v1681
      %v1703 = vpop.f32.mrf.mxu0
      %v1704 = vadd.f32 0.0, %v1703
      %1705 = vdwg.mxu0
      %v1707 = vsel %vm1524, %v1623, 0
      %v1710 = vsel %vm1524, %v1626, 0
      %1712 = vmatpush.msra.mxu0 0.0
      %1713 = vmatpush.msra.mxu0 0.0
      %1714 = vmatpush.msra.mxu0 0.0
      %1715 = vmatpush.msra.mxu0 0.0
      %1716 = vmatpush.msra.mxu0 0.0
      %1717 = vmatpush.msra.mxu0 0.0
      %1718 = vmatpush.msra.mxu0 0.0
      %1719 = vmatpush.msra.mxu0 0.0
      %1720 = vmatpush.msra.mxu0 %v1635
      %1721 = vmatpush.msra.mxu0 %v1634
      %1722 = vmatpush.msra.mxu0 %v1633
      %1723 = vmatpush.msra.mxu0 %v1632
      %1724 = vmatpush.msra.mxu0 %v1631
      %1725 = vmatpush.msra.mxu0 %v1630
      %1726 = vmatpush.msra.mxu0 %v1629
      %1727 = vmatpush.msra.mxu0 %v1628
      %1728 = vmatmul.f32.gmra.mxu0 %v1707
      %v1729 = vpop.f32.mrf.mxu0
      %v1730 = vadd.f32 %v1701, %v1729
      %1731 = vmatmul.f32.gmra.mxu0 %v1710
      %v1732 = vpop.f32.mrf.mxu0
      %v1733 = vadd.f32 %v1704, %v1732
      %1734 = vdwg.mxu0
      %s1735 = scalar_lea.vmem %s4, 32
      %v1736 = vld [vmem:[%s1735] sm:$0xff]
      %v1737 = vld [vmem:[%s1735 + $0x8] sm:$0x1]
      %v1739 = vsel %vm1594, %v1736, 0
      %v1742 = vsel %vm1594, %v1737, 0
      %1744 = vmatpush.msra.mxu0 0.0
      %1745 = vmatpush.msra.mxu0 0.0
      %1746 = vmatpush.msra.mxu0 0.0
      %1747 = vmatpush.msra.mxu0 0.0
      %1748 = vmatpush.msra.mxu0 0.0
      %1749 = vmatpush.msra.mxu0 0.0
      %1750 = vmatpush.msra.mxu0 0.0
      %1751 = vmatpush.msra.mxu0 0.0
      %1752 = vmatpush.msra.mxu0 0.0
      %1753 = vmatpush.msra.mxu0 0.0
      %1754 = vmatpush.msra.mxu0 0.0
      %1755 = vmatpush.msra.mxu0 %v1603
      %1756 = vmatpush.msra.mxu0 %v1590
      %1757 = vmatpush.msra.mxu0 %v1589
      %1758 = vmatpush.msra.mxu0 %v1588
      %1759 = vmatpush.msra.mxu0 %v1587
      %1760 = vmatmul.f32.gmra.mxu0 %v1739
      %v1761 = vpop.f32.mrf.mxu0
      %v1762 = vadd.f32 0.0, %v1761
      %1763 = vmatmul.f32.gmra.mxu0 %v1742
      %v1764 = vpop.f32.mrf.mxu0
      %v1765 = vadd.f32 0.0, %v1764
      %1766 = vdwg.mxu0
      %s1767 = scalar_lea.vmem %s5, 128
      %v1768 = vld [vmem:[%s1767] sm:$0xff]
      %v1769 = vld [vmem:[%s1767 + $0x8] sm:$0xff]
      %v1770 = vld [vmem:[%s1767 + $0x10] sm:$0xff]
      %v1771 = vld [vmem:[%s1767 + $0x18] sm:$0xff]
      %v1772 = vld [vmem:[%s1767 + $0x20] sm:$0xff]
      %v1773 = vld [vmem:[%s1767 + $0x28] sm:$0xff]
      %v1774 = vld [vmem:[%s1767 + $0x30] sm:$0xff]
      %v1775 = vld [vmem:[%s1767 + $0x38] sm:$0xff]
      %v1777 = vsel %vm1524, %v1762, 0
      %v1780 = vsel %vm1524, %v1765, 0
      %1782 = vmatpush.msra.mxu0 0.0
      %1783 = vmatpush.msra.mxu0 0.0
      %1784 = vmatpush.msra.mxu0 0.0
      %1785 = vmatpush.msra.mxu0 0.0
      %1786 = vmatpush.msra.mxu0 0.0
      %1787 = vmatpush.msra.mxu0 0.0
      %1788 = vmatpush.msra.mxu0 0.0
      %1789 = vmatpush.msra.mxu0 0.0
      %1790 = vmatpush.msra.mxu0 %v1775
      %1791 = vmatpush.msra.mxu0 %v1774
      %1792 = vmatpush.msra.mxu0 %v1773
      %1793 = vmatpush.msra.mxu0 %v1772
      %1794 = vmatpush.msra.mxu0 %v1771
      %1795 = vmatpush.msra.mxu0 %v1770
      %1796 = vmatpush.msra.mxu0 %v1769
      %1797 = vmatpush.msra.mxu0 %v1768
      %1798 = vmatmul.f32.gmra.mxu0 %v1777
      %v1799 = vpop.f32.mrf.mxu0
      %v1800 = vadd.f32 0.0, %v1799
      %1801 = vmatmul.f32.gmra.mxu0 %v1780
      %v1802 = vpop.f32.mrf.mxu0
      %v1803 = vadd.f32 0.0, %v1802
      %1804 = vdwg.mxu0
      %v1805 = vadd.f32 %v1730, %v1800
      %v1806 = vadd.f32 %v1733, %v1803
      %s1807 = scalar_lea.vmem %s4, 48
      %v1808 = vld [vmem:[%s1807] sm:$0xff]
      %v1809 = vld [vmem:[%s1807 + $0x8] sm:$0x1]
      %v1811 = vsel %vm1594, %v1808, 0
      %v1814 = vsel %vm1594, %v1809, 0
      %1816 = vmatpush.msra.mxu0 0.0
      %1817 = vmatpush.msra.mxu0 0.0
      %1818 = vmatpush.msra.mxu0 0.0
      %1819 = vmatpush.msra.mxu0 0.0
      %1820 = vmatpush.msra.mxu0 0.0
      %1821 = vmatpush.msra.mxu0 0.0
      %1822 = vmatpush.msra.mxu0 0.0
      %1823 = vmatpush.msra.mxu0 0.0
      %1824 = vmatpush.msra.mxu0 0.0
      %1825 = vmatpush.msra.mxu0 0.0
      %1826 = vmatpush.msra.mxu0 0.0
      %1827 = vmatpush.msra.mxu0 %v1603
      %1828 = vmatpush.msra.mxu0 %v1590
      %1829 = vmatpush.msra.mxu0 %v1589
      %1830 = vmatpush.msra.mxu0 %v1588
      %1831 = vmatpush.msra.mxu0 %v1587
      %1832 = vmatmul.f32.gmra.mxu0 %v1811
      %v1833 = vpop.f32.mrf.mxu0
      %v1834 = vadd.f32 0.0, %v1833
      %1835 = vmatmul.f32.gmra.mxu0 %v1814
      %v1836 = vpop.f32.mrf.mxu0
      %v1837 = vadd.f32 0.0, %v1836
      %1838 = vdwg.mxu0
      %s1839 = scalar_lea.vmem %s5, 192
      %v1840 = vld [vmem:[%s1839] sm:$0xff]
      %v1841 = vld [vmem:[%s1839 + $0x8] sm:$0xff]
      %v1842 = vld [vmem:[%s1839 + $0x10] sm:$0xff]
      %v1843 = vld [vmem:[%s1839 + $0x18] sm:$0xff]
      %v1844 = vld [vmem:[%s1839 + $0x20] sm:$0xff]
      %v1845 = vld [vmem:[%s1839 + $0x28] sm:$0xff]
      %v1846 = vld [vmem:[%s1839 + $0x30] sm:$0xff]
      %v1847 = vld [vmem:[%s1839 + $0x38] sm:$0xff]
      %v1849 = vsel %vm1524, %v1834, 0
      %v1852 = vsel %vm1524, %v1837, 0
      %1854 = vmatpush.msra.mxu0 0.0
      %1855 = vmatpush.msra.mxu0 0.0
      %1856 = vmatpush.msra.mxu0 0.0
      %1857 = vmatpush.msra.mxu0 0.0
      %1858 = vmatpush.msra.mxu0 0.0
      %1859 = vmatpush.msra.mxu0 0.0
      %1860 = vmatpush.msra.mxu0 0.0
      %1861 = vmatpush.msra.mxu0 0.0
      %1862 = vmatpush.msra.mxu0 %v1847
      %1863 = vmatpush.msra.mxu0 %v1846
      %1864 = vmatpush.msra.mxu0 %v1845
      %1865 = vmatpush.msra.mxu0 %v1844
      %1866 = vmatpush.msra.mxu0 %v1843
      %1867 = vmatpush.msra.mxu0 %v1842
      %1868 = vmatpush.msra.mxu0 %v1841
      %1869 = vmatpush.msra.mxu0 %v1840
      %1870 = vmatmul.f32.gmra.mxu0 %v1849
      %v1871 = vpop.f32.mrf.mxu0
      %v1872 = vadd.f32 0.0, %v1871
      %1873 = vmatmul.f32.gmra.mxu0 %v1852
      %v1874 = vpop.f32.mrf.mxu0
      %v1875 = vadd.f32 0.0, %v1874
      %1876 = vdwg.mxu0
      %v1877 = vadd.f32 %v1805, %v1872
      %v1878 = vadd.f32 %v1806, %v1875
      %s1879 = scalar_lea.vmem %s4, 64
      %v1880 = vld [vmem:[%s1879] sm:$0xff]
      %v1881 = vld [vmem:[%s1879 + $0x8] sm:$0x1]
      %v1883 = vsel %vm1594, %v1880, 0
      %v1886 = vsel %vm1594, %v1881, 0
      %1888 = vmatpush.msra.mxu0 0.0
      %1889 = vmatpush.msra.mxu0 0.0
      %1890 = vmatpush.msra.mxu0 0.0
      %1891 = vmatpush.msra.mxu0 0.0
      %1892 = vmatpush.msra.mxu0 0.0
      %1893 = vmatpush.msra.mxu0 0.0
      %1894 = vmatpush.msra.mxu0 0.0
      %1895 = vmatpush.msra.mxu0 0.0
      %1896 = vmatpush.msra.mxu0 0.0
      %1897 = vmatpush.msra.mxu0 0.0
      %1898 = vmatpush.msra.mxu0 0.0
      %1899 = vmatpush.msra.mxu0 %v1603
      %1900 = vmatpush.msra.mxu0 %v1590
      %1901 = vmatpush.msra.mxu0 %v1589
      %1902 = vmatpush.msra.mxu0 %v1588
      %1903 = vmatpush.msra.mxu0 %v1587
      %1904 = vmatmul.f32.gmra.mxu0 %v1883
      %v1905 = vpop.f32.mrf.mxu0
      %v1906 = vadd.f32 0.0, %v1905
      %1907 = vmatmul.f32.gmra.mxu0 %v1886
      %v1908 = vpop.f32.mrf.mxu0
      %v1909 = vadd.f32 0.0, %v1908
      %1910 = vdwg.mxu0
      %s1911 = scalar_lea.vmem %s5, 256
      %v1912 = vld [vmem:[%s1911] sm:$0xff]
      %v1913 = vld [vmem:[%s1911 + $0x8] sm:$0xff]
      %v1914 = vld [vmem:[%s1911 + $0x10] sm:$0xff]
      %v1915 = vld [vmem:[%s1911 + $0x18] sm:$0xff]
      %v1916 = vld [vmem:[%s1911 + $0x20] sm:$0xff]
      %v1917 = vld [vmem:[%s1911 + $0x28] sm:$0xff]
      %v1918 = vld [vmem:[%s1911 + $0x30] sm:$0xff]
      %v1919 = vld [vmem:[%s1911 + $0x38] sm:$0xff]
      %v1921 = vsel %vm1524, %v1906, 0
      %v1924 = vsel %vm1524, %v1909, 0
      %1926 = vmatpush.msra.mxu0 0.0
      %1927 = vmatpush.msra.mxu0 0.0
      %1928 = vmatpush.msra.mxu0 0.0
      %1929 = vmatpush.msra.mxu0 0.0
      %1930 = vmatpush.msra.mxu0 0.0
      %1931 = vmatpush.msra.mxu0 0.0
      %1932 = vmatpush.msra.mxu0 0.0
      %1933 = vmatpush.msra.mxu0 0.0
      %1934 = vmatpush.msra.mxu0 %v1919
      %1935 = vmatpush.msra.mxu0 %v1918
      %1936 = vmatpush.msra.mxu0 %v1917
      %1937 = vmatpush.msra.mxu0 %v1916
      %1938 = vmatpush.msra.mxu0 %v1915
      %1939 = vmatpush.msra.mxu0 %v1914
      %1940 = vmatpush.msra.mxu0 %v1913
      %1941 = vmatpush.msra.mxu0 %v1912
      %1942 = vmatmul.f32.gmra.mxu0 %v1921
      %v1943 = vpop.f32.mrf.mxu0
      %v1944 = vadd.f32 0.0, %v1943
      %1945 = vmatmul.f32.gmra.mxu0 %v1924
      %v1946 = vpop.f32.mrf.mxu0
      %v1947 = vadd.f32 0.0, %v1946
      %1948 = vdwg.mxu0
      %v1949 = vadd.f32 %v1877, %v1944
      %v1950 = vadd.f32 %v1878, %v1947
      %s1951 = scalar_lea.vmem %s4, 80
      %v1952 = vld [vmem:[%s1951] sm:$0xff]
      %v1953 = vld [vmem:[%s1951 + $0x8] sm:$0x1]
      %v1955 = vsel %vm1594, %v1952, 0
      %v1958 = vsel %vm1594, %v1953, 0
      %1960 = vmatpush.msra.mxu0 0.0
      %1961 = vmatpush.msra.mxu0 0.0
      %1962 = vmatpush.msra.mxu0 0.0
      %1963 = vmatpush.msra.mxu0 0.0
      %1964 = vmatpush.msra.mxu0 0.0
      %1965 = vmatpush.msra.mxu0 0.0
      %1966 = vmatpush.msra.mxu0 0.0
      %1967 = vmatpush.msra.mxu0 0.0
      %1968 = vmatpush.msra.mxu0 0.0
      %1969 = vmatpush.msra.mxu0 0.0
      %1970 = vmatpush.msra.mxu0 0.0
      %1971 = vmatpush.msra.mxu0 %v1603
      %1972 = vmatpush.msra.mxu0 %v1590
      %1973 = vmatpush.msra.mxu0 %v1589
      %1974 = vmatpush.msra.mxu0 %v1588
      %1975 = vmatpush.msra.mxu0 %v1587
      %1976 = vmatmul.f32.gmra.mxu0 %v1955
      %v1977 = vpop.f32.mrf.mxu0
      %v1978 = vadd.f32 0.0, %v1977
      %1979 = vmatmul.f32.gmra.mxu0 %v1958
      %v1980 = vpop.f32.mrf.mxu0
      %v1981 = vadd.f32 0.0, %v1980
      %1982 = vdwg.mxu0
      %s1983 = scalar_lea.vmem %s5, 320
      %v1984 = vld [vmem:[%s1983] sm:$0xff]
      %v1985 = vld [vmem:[%s1983 + $0x8] sm:$0xff]
      %v1986 = vld [vmem:[%s1983 + $0x10] sm:$0xff]
      %v1987 = vld [vmem:[%s1983 + $0x18] sm:$0xff]
      %v1988 = vld [vmem:[%s1983 + $0x20] sm:$0xff]
      %v1989 = vld [vmem:[%s1983 + $0x28] sm:$0xff]
      %v1990 = vld [vmem:[%s1983 + $0x30] sm:$0xff]
      %v1991 = vld [vmem:[%s1983 + $0x38] sm:$0xff]
      %v1993 = vsel %vm1524, %v1978, 0
      %v1996 = vsel %vm1524, %v1981, 0
      %1998 = vmatpush.msra.mxu0 0.0
      %1999 = vmatpush.msra.mxu0 0.0
      %2000 = vmatpush.msra.mxu0 0.0
      %2001 = vmatpush.msra.mxu0 0.0
      %2002 = vmatpush.msra.mxu0 0.0
      %2003 = vmatpush.msra.mxu0 0.0
      %2004 = vmatpush.msra.mxu0 0.0
      %2005 = vmatpush.msra.mxu0 0.0
      %2006 = vmatpush.msra.mxu0 %v1991
      %2007 = vmatpush.msra.mxu0 %v1990
      %2008 = vmatpush.msra.mxu0 %v1989
      %2009 = vmatpush.msra.mxu0 %v1988
      %2010 = vmatpush.msra.mxu0 %v1987
      %2011 = vmatpush.msra.mxu0 %v1986
      %2012 = vmatpush.msra.mxu0 %v1985
      %2013 = vmatpush.msra.mxu0 %v1984
      %2014 = vmatmul.f32.gmra.mxu0 %v1993
      %v2015 = vpop.f32.mrf.mxu0
      %v2016 = vadd.f32 0.0, %v2015
      %2017 = vmatmul.f32.gmra.mxu0 %v1996
      %v2018 = vpop.f32.mrf.mxu0
      %v2019 = vadd.f32 0.0, %v2018
      %2020 = vdwg.mxu0
      %v2021 = vadd.f32 %v1949, %v2016
      %v2022 = vadd.f32 %v1950, %v2019
      %s2023 = scalar_lea.vmem %s4, 96
      %v2024 = vld [vmem:[%s2023] sm:$0xff]
      %v2025 = vld [vmem:[%s2023 + $0x8] sm:$0x1]
      %v2027 = vsel %vm1594, %v2024, 0
      %v2030 = vsel %vm1594, %v2025, 0
      %2032 = vmatpush.msra.mxu0 0.0
      %2033 = vmatpush.msra.mxu0 0.0
      %2034 = vmatpush.msra.mxu0 0.0
      %2035 = vmatpush.msra.mxu0 0.0
      %2036 = vmatpush.msra.mxu0 0.0
      %2037 = vmatpush.msra.mxu0 0.0
      %2038 = vmatpush.msra.mxu0 0.0
      %2039 = vmatpush.msra.mxu0 0.0
      %2040 = vmatpush.msra.mxu0 0.0
      %2041 = vmatpush.msra.mxu0 0.0
      %2042 = vmatpush.msra.mxu0 0.0
      %2043 = vmatpush.msra.mxu0 %v1603
      %2044 = vmatpush.msra.mxu0 %v1590
      %2045 = vmatpush.msra.mxu0 %v1589
      %2046 = vmatpush.msra.mxu0 %v1588
      %2047 = vmatpush.msra.mxu0 %v1587
      %2048 = vmatmul.f32.gmra.mxu0 %v2027
      %v2049 = vpop.f32.mrf.mxu0
      %v2050 = vadd.f32 0.0, %v2049
      %2051 = vmatmul.f32.gmra.mxu0 %v2030
      %v2052 = vpop.f32.mrf.mxu0
      %v2053 = vadd.f32 0.0, %v2052
      %2054 = vdwg.mxu0
      %s2055 = scalar_lea.vmem %s5, 384
      %v2056 = vld [vmem:[%s2055] sm:$0xff]
      %v2057 = vld [vmem:[%s2055 + $0x8] sm:$0xff]
      %v2058 = vld [vmem:[%s2055 + $0x10] sm:$0xff]
      %v2059 = vld [vmem:[%s2055 + $0x18] sm:$0xff]
      %v2060 = vld [vmem:[%s2055 + $0x20] sm:$0xff]
      %v2061 = vld [vmem:[%s2055 + $0x28] sm:$0xff]
      %v2062 = vld [vmem:[%s2055 + $0x30] sm:$0xff]
      %v2063 = vld [vmem:[%s2055 + $0x38] sm:$0xff]
      %v2065 = vsel %vm1524, %v2050, 0
      %v2068 = vsel %vm1524, %v2053, 0
      %2070 = vmatpush.msra.mxu0 0.0
      %2071 = vmatpush.msra.mxu0 0.0
      %2072 = vmatpush.msra.mxu0 0.0
      %2073 = vmatpush.msra.mxu0 0.0
      %2074 = vmatpush.msra.mxu0 0.0
      %2075 = vmatpush.msra.mxu0 0.0
      %2076 = vmatpush.msra.mxu0 0.0
      %2077 = vmatpush.msra.mxu0 0.0
      %2078 = vmatpush.msra.mxu0 %v2063
      %2079 = vmatpush.msra.mxu0 %v2062
      %2080 = vmatpush.msra.mxu0 %v2061
      %2081 = vmatpush.msra.mxu0 %v2060
      %2082 = vmatpush.msra.mxu0 %v2059
      %2083 = vmatpush.msra.mxu0 %v2058
      %2084 = vmatpush.msra.mxu0 %v2057
      %2085 = vmatpush.msra.mxu0 %v2056
      %2086 = vmatmul.f32.gmra.mxu0 %v2065
      %v2087 = vpop.f32.mrf.mxu0
      %v2088 = vadd.f32 0.0, %v2087
      %2089 = vmatmul.f32.gmra.mxu0 %v2068
      %v2090 = vpop.f32.mrf.mxu0
      %v2091 = vadd.f32 0.0, %v2090
      %2092 = vdwg.mxu0
      %v2093 = vadd.f32 %v2021, %v2088
      %v2094 = vadd.f32 %v2022, %v2091
      %s2095 = scalar_lea.vmem %s4, 112
      %v2096 = vld [vmem:[%s2095] sm:$0xff]
      %v2097 = vld [vmem:[%s2095 + $0x8] sm:$0x1]
      %v2099 = vsel %vm1594, %v2096, 0
      %v2102 = vsel %vm1594, %v2097, 0
      %2104 = vmatpush.msra.mxu0 0.0
      %2105 = vmatpush.msra.mxu0 0.0
      %2106 = vmatpush.msra.mxu0 0.0
      %2107 = vmatpush.msra.mxu0 0.0
      %2108 = vmatpush.msra.mxu0 0.0
      %2109 = vmatpush.msra.mxu0 0.0
      %2110 = vmatpush.msra.mxu0 0.0
      %2111 = vmatpush.msra.mxu0 0.0
      %2112 = vmatpush.msra.mxu0 0.0
      %2113 = vmatpush.msra.mxu0 0.0
      %2114 = vmatpush.msra.mxu0 0.0
      %2115 = vmatpush.msra.mxu0 %v1603
      %2116 = vmatpush.msra.mxu0 %v1590
      %2117 = vmatpush.msra.mxu0 %v1589
      %2118 = vmatpush.msra.mxu0 %v1588
      %2119 = vmatpush.msra.mxu0 %v1587
      %2120 = vmatmul.f32.gmra.mxu0 %v2099
      %v2121 = vpop.f32.mrf.mxu0
      %v2122 = vadd.f32 0.0, %v2121
      %2123 = vmatmul.f32.gmra.mxu0 %v2102
      %v2124 = vpop.f32.mrf.mxu0
      %v2125 = vadd.f32 0.0, %v2124
      %2126 = vdwg.mxu0
      %s2127 = scalar_lea.vmem %s5, 448
      %v2128 = vld [vmem:[%s2127] sm:$0xff]
      %v2129 = vld [vmem:[%s2127 + $0x8] sm:$0xff]
      %v2130 = vld [vmem:[%s2127 + $0x10] sm:$0xff]
      %v2131 = vld [vmem:[%s2127 + $0x18] sm:$0xff]
      %v2132 = vld [vmem:[%s2127 + $0x20] sm:$0xff]
      %v2133 = vld [vmem:[%s2127 + $0x28] sm:$0xff]
      %v2134 = vld [vmem:[%s2127 + $0x30] sm:$0xff]
      %v2135 = vld [vmem:[%s2127 + $0x38] sm:$0xff]
      %v2137 = vsel %vm1524, %v2122, 0
      %v2140 = vsel %vm1524, %v2125, 0
      %2142 = vmatpush.msra.mxu0 0.0
      %2143 = vmatpush.msra.mxu0 0.0
      %2144 = vmatpush.msra.mxu0 0.0
      %2145 = vmatpush.msra.mxu0 0.0
      %2146 = vmatpush.msra.mxu0 0.0
      %2147 = vmatpush.msra.mxu0 0.0
      %2148 = vmatpush.msra.mxu0 0.0
      %2149 = vmatpush.msra.mxu0 0.0
      %2150 = vmatpush.msra.mxu0 %v2135
      %2151 = vmatpush.msra.mxu0 %v2134
      %2152 = vmatpush.msra.mxu0 %v2133
      %2153 = vmatpush.msra.mxu0 %v2132
      %2154 = vmatpush.msra.mxu0 %v2131
      %2155 = vmatpush.msra.mxu0 %v2130
      %2156 = vmatpush.msra.mxu0 %v2129
      %2157 = vmatpush.msra.mxu0 %v2128
      %2158 = vmatmul.f32.gmra.mxu0 %v2137
      %v2159 = vpop.f32.mrf.mxu0
      %v2160 = vadd.f32 0.0, %v2159
      %2161 = vmatmul.f32.gmra.mxu0 %v2140
      %v2162 = vpop.f32.mrf.mxu0
      %v2163 = vadd.f32 0.0, %v2162
      %2164 = vdwg.mxu0
      %v2165 = vadd.f32 %v2093, %v2160
      %v2166 = vadd.f32 %v2094, %v2163
      %s2167 = scalar_lea.vmem %s4, 128
      %v2168 = vld [vmem:[%s2167] sm:$0xff]
      %v2169 = vld [vmem:[%s2167 + $0x8] sm:$0x1]
      %v2171 = vsel %vm1594, %v2168, 0
      %v2174 = vsel %vm1594, %v2169, 0
      %2176 = vmatpush.msra.mxu0 0.0
      %2177 = vmatpush.msra.mxu0 0.0
      %2178 = vmatpush.msra.mxu0 0.0
      %2179 = vmatpush.msra.mxu0 0.0
      %2180 = vmatpush.msra.mxu0 0.0
      %2181 = vmatpush.msra.mxu0 0.0
      %2182 = vmatpush.msra.mxu0 0.0
      %2183 = vmatpush.msra.mxu0 0.0
      %2184 = vmatpush.msra.mxu0 0.0
      %2185 = vmatpush.msra.mxu0 0.0
      %2186 = vmatpush.msra.mxu0 0.0
      %2187 = vmatpush.msra.mxu0 %v1603
      %2188 = vmatpush.msra.mxu0 %v1590
      %2189 = vmatpush.msra.mxu0 %v1589
      %2190 = vmatpush.msra.mxu0 %v1588
      %2191 = vmatpush.msra.mxu0 %v1587
      %2192 = vmatmul.f32.gmra.mxu0 %v2171
      %v2193 = vpop.f32.mrf.mxu0
      %v2194 = vadd.f32 0.0, %v2193
      %2195 = vmatmul.f32.gmra.mxu0 %v2174
      %v2196 = vpop.f32.mrf.mxu0
      %v2197 = vadd.f32 0.0, %v2196
      %2198 = vdwg.mxu0
      %s2199 = scalar_lea.vmem %s5, 512
      %v2200 = vld [vmem:[%s2199] sm:$0xff]
      %v2201 = vld [vmem:[%s2199 + $0x8] sm:$0xff]
      %v2202 = vld [vmem:[%s2199 + $0x10] sm:$0xff]
      %v2203 = vld [vmem:[%s2199 + $0x18] sm:$0xff]
      %v2204 = vld [vmem:[%s2199 + $0x20] sm:$0xff]
      %v2205 = vld [vmem:[%s2199 + $0x28] sm:$0xff]
      %v2206 = vld [vmem:[%s2199 + $0x30] sm:$0xff]
      %v2207 = vld [vmem:[%s2199 + $0x38] sm:$0xff]
      %v2209 = vsel %vm1524, %v2194, 0
      %v2212 = vsel %vm1524, %v2197, 0
      %2214 = vmatpush.msra.mxu0 0.0
      %2215 = vmatpush.msra.mxu0 0.0
      %2216 = vmatpush.msra.mxu0 0.0
      %2217 = vmatpush.msra.mxu0 0.0
      %2218 = vmatpush.msra.mxu0 0.0
      %2219 = vmatpush.msra.mxu0 0.0
      %2220 = vmatpush.msra.mxu0 0.0
      %2221 = vmatpush.msra.mxu0 0.0
      %2222 = vmatpush.msra.mxu0 %v2207
      %2223 = vmatpush.msra.mxu0 %v2206
      %2224 = vmatpush.msra.mxu0 %v2205
      %2225 = vmatpush.msra.mxu0 %v2204
      %2226 = vmatpush.msra.mxu0 %v2203
      %2227 = vmatpush.msra.mxu0 %v2202
      %2228 = vmatpush.msra.mxu0 %v2201
      %2229 = vmatpush.msra.mxu0 %v2200
      %2230 = vmatmul.f32.gmra.mxu0 %v2209
      %v2231 = vpop.f32.mrf.mxu0
      %v2232 = vadd.f32 0.0, %v2231
      %2233 = vmatmul.f32.gmra.mxu0 %v2212
      %v2234 = vpop.f32.mrf.mxu0
      %v2235 = vadd.f32 0.0, %v2234
      %2236 = vdwg.mxu0
      %v2237 = vadd.f32 %v2165, %v2232
      %v2238 = vadd.f32 %v2166, %v2235
      %v2239 = vsel %vm562, %v2238, 0.0
      %v2240 = vadd.f32 %v2237, %v2239
      %v2241 = vrot.slane %v2240, 4
      %v2242 = vadd.f32 %v2240, %v2241
      %v2243 = vrot.slane %v2242, 2
      %v2244 = vadd.f32 %v2242, %v2243
      %v2245 = vrot.slane %v2244, 1
      %v2246 = vadd.f32 %v2244, %v2245
      %v2247 = vmul.f32 %v2237, %v2237
      %v2248 = vmul.f32 %v2238, %v2238
      %v2249 = vsel %vm562, %v2248, 0.0
      %v2250 = vadd.f32 %v2247, %v2249
      %v2251 = vrot.slane %v2250, 4
      %v2252 = vadd.f32 %v2250, %v2251
      %v2253 = vrot.slane %v2252, 2
      %v2254 = vadd.f32 %v2252, %v2253
      %v2255 = vrot.slane %v2254, 1
      %v2256 = vadd.f32 %v2254, %v2255
      %v2257 = vmul.f32 %v2246, 0.11111111
      %v2258 = vmul.f32 %v2256, 0.11111111
      %v2259 = vmul.f32 %v2257, %v2257
      %v2260 = vsub.f32 %v2258, %v2259
      %v2261 = vmax.f32 %v2260, 0.0
      %v2262 = vadd.f32 %v2261, 1e-05
      %v2263 = vrsqrt.pop %v2262
      %v2264 = vmul.f32 %v2263, %v2262
      %v2265 = vmul.f32 %v2264, %v2263
      %v2266 = vmul.f32 0.5, %v2265
      %v2267 = vsub.f32 1.5, %v2266
      %v2268 = vmul.f32 %v2263, %v2267
      %vm2269 = vweird.f32 %v2262
      %vm2270 = vweird.f32 %v2263
      %vm2271 = vmor %vm2269, %vm2270
      %v2272 = vsel %vm2271, %v2263, %v2268
      %v2273 = vsub.f32 %v2237, %v2257
      %v2274 = vsub.f32 %v2238, %v2257
      %v2275 = vmul.f32 %v2273, %v2272
      %v2276 = vmul.f32 %v2274, %v2272
      %v2277 = vmax.f32 %v2275, 0.0
      %v2278 = vmax.f32 %v2276, 0.0
      %2279 = vst [vmem:[%s251] sm:$0xff] %v2277
      %2280 = vst [vmem:[%s251 + $0x8] sm:$0x1] %v2278
      %p2281 = scmp.lt.s32.totalorder %s17, 1
      %s2282 = scalar_select %p2281, %s17, 1
      %s2283 = smul.addr %s2282, 2
      %s2284 = smul.addr %s2283, 8
      %s2285 = scalar_lea.vmem %s6, %s2284
      // Predicated region
      $region45: #{encoder_forward.1} parent=43 // pred_check
        %p2286 = pneg %p166
      $region46: #{encoder_forward.1} parent=43 // pred_check_branch
        %2288 = sbr.rel (%p2286) target = $region48
      $region47: #{encoder_forward.1} parent=43 // pred_region
        _
      $region48: #{encoder_forward.1} parent=43 // pred_fallthru
        _
    $region44: #{encoder_forward.1} parent=5 // pred_fallthru
      _
    %p2289 = scmp.le.s32.totalorder 2, %s12
    // Predicated region
    $region49: #{encoder_forward.1} parent=5 // pred_check
      %p2290 = pneg %p2289
    $region50: #{encoder_forward.1} parent=5 // pred_check_branch
      %2292 = sbr.rel (%p2290) target = $region52
    $region51: #{encoder_forward.1} parent=5 // pred_region
      %s2293 = ssub.s32 %s12, 2
      // Predicated region
      $region53: #{encoder_forward.1} parent=51 // pred_check
        %p2294 = pneg %p172
      $region54: #{encoder_forward.1} parent=51 // pred_check_branch
        %2296 = sbr.rel (%p2294) target = $region56
      $region55: #{encoder_forward.1} parent=51 // pred_region
        %p2297 = scmp.lt.s32.totalorder %s18, 1
        %s2298 = scalar_select %p2297, %s18, 1
        %s2299 = smul.addr %s2298, 2
        %s2300 = smul.addr %s2299, 8
        %s2301 = scalar_lea.vmem %s6, %s2300
      $region56: #{encoder_forward.1} parent=51 // pred_fallthru
        _
    $region52: #{encoder_forward.1} parent=5 // pred_fallthru
      _
  $region6: #{encoder_forward.1} parent=0 // loop_footer
    %s16 = sadd.s32 1, %s12
  $region7: #{encoder_forward.1} parent=0 // loop_footer_branch
    %11 = sbr.rel target = $region3
  $region8: #{encoder_forward.1} parent=0 // loop_exit
    _

</llo_original>
